<compile_context>
chip_gen: v6e
topology: v6e:2x2x1
jax: 0.10.0
libtpu: 0.0.40
codegen_flags: <defaults>
</compile_context>

<pallas_src>
import math
import functools
import numpy as np
import jax
import jax.numpy as jnp
from jax.experimental import pallas as pl
from jax.experimental.pallas import tpu as pltpu

# ---------------------------- configuration (mirrors MACGCCDoA defaults, small sizes) -------------
SAMPLE_RATE = 16000
N_FFT = 64
WINDOW_LENGTH = 64
HOP_LENGTH = 32
C_SOUND = 343.0
ELEV_RES, ELEV_RANGE = 5.0, (0.0, 180.0)
AZ_RES, AZ_RANGE = 5.0, (-180.0, 180.0)

N_FREQ = N_FFT // 2 + 1          # 33 rfft bins
F_PAD = 64                       # rfft bins padded to 64 lanes
TWO_F = 2 * F_PAD                # [Re | Im] slab per frame / per pair = 128 lanes
EPS = 1e-8
APPROX_RECIP = True              # EUP approximate reciprocal for PHAT; set False if tolerances tighten

# Regular tetrahedron with edge 0.18 m -> all microphone pair distances equal
# (required so torch.stack(gcc_outputs, dim=-1) in the reference forward is well defined).
_s = 0.18 / (2.0 * math.sqrt(2.0))
MIC_POSITIONS = np.array([[1., 1., 1.],
                          [1., -1., -1.],
                          [-1., 1., -1.],
                          [-1., -1., 1.]], dtype=np.float64) * _s
N_MICS = MIC_POSITIONS.shape[0]
MIC_PAIRS = [(i, j) for i in range(N_MICS) for j in range(i + 1, N_MICS)]   # triu ordering
N_PAIRS = len(MIC_PAIRS)

_dists = np.array([np.linalg.norm(MIC_POSITIONS[i] - MIC_POSITIONS[j]) for i, j in MIC_PAIRS])
_t_max_samples = np.floor(_dists / 343.0 * SAMPLE_RATE).astype(np.int64)
assert np.all(_t_max_samples == _t_max_samples[0]), "equal pair distances required"
MAX_DELAY = int(_t_max_samples[0])          # 8
LAGS = 2 * MAX_DELAY                        # 16 lags per pair
FEAT_DIM = N_PAIRS * LAGS                   # 96 == 2 * sum(t_max_samples)
D_IN = FEAT_DIM + MIC_POSITIONS.size        # + flattened mic positions -> 108


def _make_angles(rng, res):
    span = abs(rng[1] - rng[0])
    n = math.ceil(span / res) if span else 1
    if span:
        return np.arange(n, dtype=np.float64) * res + rng[0]
    return np.array([rng[0]], dtype=np.float64)


N_ELEV = len(_make_angles(ELEV_RANGE, ELEV_RES))    # 36 classes
N_AZ = len(_make_angles(AZ_RANGE, AZ_RES))          # 72 classes
N_OUT = N_ELEV + N_AZ                               # 108
OUT_PAD = 128                                       # lane-dense output slab


# ------------------------------- constant DFT / iDFT / window builders ---------------------------
def _hann():
    n = np.arange(WINDOW_LENGTH, dtype=np.float64)
    return 0.5 - 0.5 * np.cos(2.0 * np.pi * n / WINDOW_LENGTH)     # periodic hann


def _dft():
    n = np.arange(WINDOW_LENGTH, dtype=np.float64)[:, None]
    k = np.arange(N_FREQ, dtype=np.float64)[None, :]
    ang = 2.0 * np.pi * n * k / N_FFT
    return np.cos(ang), np.sin(ang)                                # (W, F)


def _idft():
    # lag order [-max_delay .. -1, 0 .. max_delay-1]  == concat(cc[-md:], cc[:md]) of irfft(n_fft)
    lags = np.concatenate([np.arange(N_FFT - MAX_DELAY, N_FFT),
                           np.arange(0, MAX_DELAY)]).astype(np.float64)
    k = np.arange(N_FREQ, dtype=np.float64)[:, None]
    n = lags[None, :]
    wgt = np.full((N_FREQ, 1), 2.0)
    wgt[0, 0] = 1.0
    wgt[-1, 0] = 1.0
    ang = 2.0 * np.pi * k * n / N_FFT
    return wgt * np.cos(ang) / N_FFT, -wgt * np.sin(ang) / N_FFT   # (F, L)


# ------------------------------ host-side one-time weight prepacking -----------------------------
def prepare_fused_params(params, n_samples):
    """Fold framing+window+DFT into K, inverse-DFT+classifiers into W, mic positions into bias."""
    n_frames = (n_samples - WINDOW_LENGTH) // HOP_LENGTH + 1

    # K[s, t*128 + k]      =  win[s - t*H] * cos(2*pi*(s - t*H)*k / N_FFT)   (Re columns)
    # K[s, t*128 + 64 + k] = -win[s - t*H] * sin(...)                        (Im columns)
    win = _hann()[:, None]
    cosm, sinm = _dft()
    k_stft = np.zeros((n_samples, n_frames * TWO_F), np.float64)
    for t in range(n_frames):
        s0 = t * HOP_LENGTH
        k_stft[s0:s0 + WINDOW_LENGTH, t * TWO_F: t * TWO_F + N_FREQ] = win * cosm
        k_stft[s0:s0 + WINDOW_LENGTH, t * TWO_F + F_PAD: t * TWO_F + F_PAD + N_FREQ] = -win * sinm

    icos, isin = _idft()
    w_el = np.asarray(params["w_el"], np.float64)                  # (D_IN, N_ELEV)
    b_el = np.asarray(params["b_el"], np.float64).reshape(-1)
    w_az = np.asarray(params["w_az"], np.float64)                  # (D_IN, N_AZ)
    b_az = np.asarray(params["b_az"], np.float64).reshape(-1)

    # feature rows of both heads; feature index = lag * N_PAIRS + pair (torch.stack(..., -1) order)
    w_cls = np.concatenate([w_el[:FEAT_DIM], w_az[:FEAT_DIM]], axis=1)          # (96, 108)
    w_big = np.zeros((N_PAIRS * TWO_F, OUT_PAD), np.float64)
    for p in range(N_PAIRS):
        rows_p = w_cls[np.arange(LAGS) * N_PAIRS + p, :]                        # (L, 108)
        base = p * TWO_F
        w_big[base:base + N_FREQ, :N_OUT] = icos @ rows_p                       # Re part
        w_big[base + F_PAD:base + F_PAD + N_FREQ, :N_OUT] = isin @ rows_p       # Im part

    mic_flat = MIC_POSITIONS.reshape(-1)
    b_big = np.zeros((1, OUT_PAD), np.float64)
    b_big[0, :N_ELEV] = b_el + mic_flat @ w_el[FEAT_DIM:]
    b_big[0, N_ELEV:N_OUT] = b_az + mic_flat @ w_az[FEAT_DIM:]

    return {"k_stft": jnp.asarray(k_stft, jnp.float32),    # (S, T*128)
            "w_big": jnp.asarray(w_big, jnp.float32),      # (768, 128)
            "b_big": jnp.asarray(b_big, jnp.float32)}      # (1, 128)


# ----------------------------------------- fused Pallas kernel -----------------------------------
def _make_kernel(b_tile, n_frames):
    T = n_frames

    def kernel(x_ref, k_ref, w_ref, b_ref, out_ref):
        # x_ref: (1, b_tile*M, S), row = b_local*M + m
        rows = x_ref[0]                                                         # (bt*M, S)

        # 1) Framing + Hann + rDFT as ONE MXU dot (lanes = frame-major [Re|Im] slabs of 128).
        spec = jnp.dot(rows, k_ref[...], preferred_element_type=jnp.float32)    # (bt*M, T*128)

        # 2) Regroup frames into rows (per mic), via 128-lane-aligned register slices + concat.
        #    Row order inside each mic block: (b_local, t).
        mic_re, mic_im = [], []
        for m in range(N_MICS):
            pieces = []
            for b in range(b_tile):
                r = b * N_MICS + m
                for t in range(T):
                    pieces.append(spec[r:r + 1, t * TWO_F:(t + 1) * TWO_F])     # (1, 128)
            blk = pieces[0] if len(pieces) == 1 else jnp.concatenate(pieces, axis=0)  # (bt*T, 128)
            mic_re.append(blk[:, :F_PAD])                                       # (bt*T, 64)
            mic_im.append(blk[:, F_PAD:])                                       # (bt*T, 64)

        # 3) GCC-PHAT per pair + per-pair accumulation of (iDFT + classifiers + bias) weights.
        acc = jnp.zeros((b_tile * T, OUT_PAD), jnp.float32)
        for p, (i, j) in enumerate(MIC_PAIRS):
            rre = mic_re[i] * mic_re[j] + mic_im[i] * mic_im[j]
            rim = mic_im[i] * mic_re[j] - mic_re[i] * mic_im[j]
            inv = pl.reciprocal(jnp.sqrt(rre * rre + rim * rim) + EPS,
                                approx=APPROX_RECIP)                            # EUP slot
            base = p * TWO_F
            acc = acc + jnp.dot(rre * inv, w_ref[base:base + F_PAD, :],
                                preferred_element_type=jnp.float32)
            acc = acc + jnp.dot(rim * inv, w_ref[base + F_PAD:base + TWO_F, :],
                                preferred_element_type=jnp.float32)
        acc = acc + b_ref[...]                                                   # fused bias

        # 4) Lane-dense 128-wide logits, one aligned (T, 128) store per local batch item.
        for b in range(b_tile):
            out_ref[b] = acc[b * T:(b + 1) * T, :]

    return kernel


def mac_gcc_doa_forward(x, fused, b_tile=None):
    B, M, S = x.shape
    assert M == N_MICS
    T = (S - WINDOW_LENGTH) // HOP_LENGTH + 1                      # center=False frame count
    assert fused["k_stft"].shape == (S, T * TWO_F)

    if b_tile is None:
        # Fill MXU rows (target b_tile*T rows) but keep >= 2 grid steps so both v7x TensorCores
        # get work, and cap the unrolled regroup size.
        b_tile = max(1, min(B // 2, 128 // T, 8)) if B > 1 else 1
        while B % b_tile:
            b_tile -= 1
    assert B % b_tile == 0

    # Host-side grouping: per grid step the input block is a 2-D (b_tile*M, S) row slab.
    x_grp = x.reshape(B // b_tile, b_tile * M, S)

    logits = pl.pallas_call(
        _make_kernel(b_tile, T),
        out_shape=jax.ShapeDtypeStruct((B, T, OUT_PAD), jnp.float32),
        grid=(B // b_tile,),
        in_specs=[
            pl.BlockSpec((1, b_tile * M, S), lambda g: (g, 0, 0)),
            pl.BlockSpec((S, T * TWO_F), lambda g: (0, 0)),
            pl.BlockSpec((N_PAIRS * TWO_F, OUT_PAD), lambda g: (0, 0)),
            pl.BlockSpec((1, OUT_PAD), lambda g: (0, 0)),
        ],
        out_specs=pl.BlockSpec((b_tile, T, OUT_PAD), lambda g: (g, 0, 0)),
        compiler_params=pltpu.CompilerParams(dimension_semantics=("parallel",)),
    )(x_grp, fused["k_stft"], fused["w_big"], fused["b_big"])
    return logits[:, :, :N_ELEV], logits[:, :, N_ELEV:N_OUT]


# --------------------------------- pure-JAX reference (original module math) ---------------------
WINDOW_J = jnp.asarray(_hann(), jnp.float32)
_cosm_np, _sinm_np = _dft()
COS_M = jnp.asarray(_cosm_np, jnp.float32)
SIN_M = jnp.asarray(_sinm_np, jnp.float32)
_icos_np, _isin_np = _idft()
ICOS_M = jnp.asarray(_icos_np, jnp.float32)
ISIN_M = jnp.asarray(_isin_np, jnp.float32)
MIC_FLAT = jnp.asarray(MIC_POSITIONS.reshape(-1), jnp.float32)
_HI = jax.lax.Precision.HIGHEST


def mac_gcc_doa_reference(x, params):
    B, M, S = x.shape
    T = (S - WINDOW_LENGTH) // HOP_LENGTH + 1
    idx = np.arange(T)[:, None] * HOP_LENGTH + np.arange(WINDOW_LENGTH)[None, :]
    frames = x[:, :, idx]                                          # (B, M, T, W)
    fw = frames * WINDOW_J
    xre = jnp.einsum("bmtw,wf->bmtf", fw, COS_M, precision=_HI)
    xim = -jnp.einsum("bmtw,wf->bmtf", fw, SIN_M, precision=_HI)
    ccs = []
    for (i, j) in MIC_PAIRS:
        rre = xre[:, i] * xre[:, j] + xim[:, i] * xim[:, j]
        rim = xim[:, i] * xre[:, j] - xre[:, i] * xim[:, j]
        mag = jnp.sqrt(rre * rre + rim * rim) + EPS
        ccs.append(jnp.einsum("btf,fl->btl", rre / mag, ICOS_M, precision=_HI)
                   + jnp.einsum("btf,fl->btl", rim / mag, ISIN_M, precision=_HI))
    feat = jnp.stack(ccs, axis=-1).reshape(B, T, -1)               # torch.stack(..., -1).reshape
    mic = jnp.broadcast_to(MIC_FLAT[None, None, :], (B, T, MIC_FLAT.shape[0]))
    xcat = jnp.concatenate([feat, mic], axis=-1)
    el = jnp.einsum("btd,dc->btc", xcat, params["w_el"], precision=_HI) + params["b_el"]
    az = jnp.einsum("btd,dc->btc", xcat, params["w_az"], precision=_HI) + params["b_az"]
    return el, az


# ------------------------------------------------ main -------------------------------------------
if __name__ == "__main__":
    key = jax.random.PRNGKey(0)
    k_x, k_we, k_be, k_wa, k_ba = jax.random.split(key, 5)

    B = 2
    N_FRAMES = 8
    N_SAMPLES = WINDOW_LENGTH + (N_FRAMES - 1) * HOP_LENGTH        # 288 -> 8 STFT frames
    x = jax.random.normal(k_x, (B, N_MICS, N_SAMPLES), dtype=jnp.float32)

    bound = 1.0 / math.sqrt(D_IN)                                  # nn.Linear-style init
    params = {
        "w_el": jax.random.uniform(k_we, (D_IN, N_ELEV), jnp.float32, -bound, bound),
        "b_el": jax.random.uniform(k_be, (1, N_ELEV), jnp.float32, -bound, bound),
        "w_az": jax.random.uniform(k_wa, (D_IN, N_AZ), jnp.float32, -bound, bound),
        "b_az": jax.random.uniform(k_ba, (1, N_AZ), jnp.float32, -bound, bound),
    }

    fused = prepare_fused_params(params, N_SAMPLES)                # one-time weight prepacking
    el_ref, az_ref = mac_gcc_doa_reference(x, params)

    # Path 1: default tiling (b_tile=1 at B=2 -> 2 parallel grid steps, both v7x TCs busy).
    el, az = jax.jit(mac_gcc_doa_forward)(x, fused)
    el, az = jax.block_until_ready((el, az))
    np.testing.assert_allclose(np.asarray(el), np.asarray(el_ref), rtol=2e-3, atol=2e-3)
    np.testing.assert_allclose(np.asarray(az), np.asarray(az_ref), rtol=2e-3, atol=2e-3)
    assert el.shape == (B, N_FRAMES, N_ELEV) and az.shape == (B, N_FRAMES, N_AZ)

    # Path 2: batched grid step (b_tile=2 -> local batch folded into the MXU row dimension).
    el2, az2 = jax.jit(functools.partial(mac_gcc_doa_forward, b_tile=2))(x, fused)
    el2, az2 = jax.block_until_ready((el2, az2))
    np.testing.assert_allclose(np.asarray(el2), np.asarray(el_ref), rtol=2e-3, atol=2e-3)
    np.testing.assert_allclose(np.asarray(az2), np.asarray(az_ref), rtol=2e-3, atol=2e-3)

    print("KERNEL_OK")
</pallas_src>

<mosaic_0001>
module attributes {stable_mosaic.version = 11 : i64} {
  func.func @kernel(%arg0: i32, %arg1: memref<1x4x288xf32, #tpu.memory_space<vmem>>, %arg2: memref<288x1024xf32, #tpu.memory_space<vmem>>, %arg3: memref<768x128xf32, #tpu.memory_space<vmem>>, %arg4: memref<1x128xf32, #tpu.memory_space<vmem>>, %arg5: memref<1x8x128xf32, #tpu.memory_space<vmem>>) attributes {dimension_semantics = [#tpu.dimension_semantics<parallel>], iteration_bounds = array<i64: 2>, scalar_prefetch = 0 : i64, scratch_operands = 0 : i64, tpu.core_type = #tpu.core_type<tc>, window_params = [{transform_indices = @transform_0, window_bounds = array<i64: 1, 4, 288>}, {pipeline_mode = #tpu.pipeline_mode<synchronous>, transform_indices = @transform_1, window_bounds = array<i64: 288, 1024>}, {pipeline_mode = #tpu.pipeline_mode<synchronous>, transform_indices = @transform_2, window_bounds = array<i64: 768, 128>}, {pipeline_mode = #tpu.pipeline_mode<synchronous>, transform_indices = @transform_3, window_bounds = array<i64: 1, 128>}, {transform_indices = @transform_4, window_bounds = array<i64: 1, 8, 128>}]} {
    %c0 = arith.constant 0 : index
    %c0_0 = arith.constant 0 : index
    %c0_1 = arith.constant 0 : index
    %0 = vector.load %arg1[%c0, %c0_0, %c0_1] : memref<1x4x288xf32, #tpu.memory_space<vmem>>, vector<1x4x288xf32>
    %1 = vector.shape_cast %0 : vector<1x4x288xf32> to vector<4x288xf32>
    %c0_2 = arith.constant 0 : index
    %c0_3 = arith.constant 0 : index
    %2 = vector.load %arg2[%c0_2, %c0_3] : memref<288x1024xf32, #tpu.memory_space<vmem>>, vector<288x1024xf32>
    %cst = arith.constant dense<0.000000e+00> : vector<4x1024xf32>
    %3 = tpu.matmul %1, %2, %cst {dimension_numbers = #tpu.dot_dimension_numbers<[1], [0], [0], [1], [0, 0, 1, 1], [], []>} : vector<4x288xf32>, vector<288x1024xf32>, vector<4x1024xf32> -> vector<4x1024xf32>
    %4 = vector.extract_strided_slice %3 {offsets = [0, 0], sizes = [1, 128], strides = [1, 1]} : vector<4x1024xf32> to vector<1x128xf32>
    %5 = vector.extract_strided_slice %3 {offsets = [0, 128], sizes = [1, 128], strides = [1, 1]} : vector<4x1024xf32> to vector<1x128xf32>
    %6 = vector.extract_strided_slice %3 {offsets = [0, 256], sizes = [1, 128], strides = [1, 1]} : vector<4x1024xf32> to vector<1x128xf32>
    %7 = vector.extract_strided_slice %3 {offsets = [0, 384], sizes = [1, 128], strides = [1, 1]} : vector<4x1024xf32> to vector<1x128xf32>
    %8 = vector.extract_strided_slice %3 {offsets = [0, 512], sizes = [1, 128], strides = [1, 1]} : vector<4x1024xf32> to vector<1x128xf32>
    %9 = vector.extract_strided_slice %3 {offsets = [0, 640], sizes = [1, 128], strides = [1, 1]} : vector<4x1024xf32> to vector<1x128xf32>
    %10 = vector.extract_strided_slice %3 {offsets = [0, 768], sizes = [1, 128], strides = [1, 1]} : vector<4x1024xf32> to vector<1x128xf32>
    %11 = vector.extract_strided_slice %3 {offsets = [0, 896], sizes = [1, 128], strides = [1, 1]} : vector<4x1024xf32> to vector<1x128xf32>
    %12 = tpu.concatenate %4, %5, %6, %7, %8, %9, %10, %11 in 0 : vector<1x128xf32>, vector<1x128xf32>, vector<1x128xf32>, vector<1x128xf32>, vector<1x128xf32>, vector<1x128xf32>, vector<1x128xf32>, vector<1x128xf32> -> vector<8x128xf32>
    %13 = vector.extract_strided_slice %12 {offsets = [0, 0], sizes = [8, 64], strides = [1, 1]} : vector<8x128xf32> to vector<8x64xf32>
    %14 = vector.extract_strided_slice %12 {offsets = [0, 64], sizes = [8, 64], strides = [1, 1]} : vector<8x128xf32> to vector<8x64xf32>
    %15 = vector.extract_strided_slice %3 {offsets = [1, 0], sizes = [1, 128], strides = [1, 1]} : vector<4x1024xf32> to vector<1x128xf32>
    %16 = vector.extract_strided_slice %3 {offsets = [1, 128], sizes = [1, 128], strides = [1, 1]} : vector<4x1024xf32> to vector<1x128xf32>
    %17 = vector.extract_strided_slice %3 {offsets = [1, 256], sizes = [1, 128], strides = [1, 1]} : vector<4x1024xf32> to vector<1x128xf32>
    %18 = vector.extract_strided_slice %3 {offsets = [1, 384], sizes = [1, 128], strides = [1, 1]} : vector<4x1024xf32> to vector<1x128xf32>
    %19 = vector.extract_strided_slice %3 {offsets = [1, 512], sizes = [1, 128], strides = [1, 1]} : vector<4x1024xf32> to vector<1x128xf32>
    %20 = vector.extract_strided_slice %3 {offsets = [1, 640], sizes = [1, 128], strides = [1, 1]} : vector<4x1024xf32> to vector<1x128xf32>
    %21 = vector.extract_strided_slice %3 {offsets = [1, 768], sizes = [1, 128], strides = [1, 1]} : vector<4x1024xf32> to vector<1x128xf32>
    %22 = vector.extract_strided_slice %3 {offsets = [1, 896], sizes = [1, 128], strides = [1, 1]} : vector<4x1024xf32> to vector<1x128xf32>
    %23 = tpu.concatenate %15, %16, %17, %18, %19, %20, %21, %22 in 0 : vector<1x128xf32>, vector<1x128xf32>, vector<1x128xf32>, vector<1x128xf32>, vector<1x128xf32>, vector<1x128xf32>, vector<1x128xf32>, vector<1x128xf32> -> vector<8x128xf32>
    %24 = vector.extract_strided_slice %23 {offsets = [0, 0], sizes = [8, 64], strides = [1, 1]} : vector<8x128xf32> to vector<8x64xf32>
    %25 = vector.extract_strided_slice %23 {offsets = [0, 64], sizes = [8, 64], strides = [1, 1]} : vector<8x128xf32> to vector<8x64xf32>
    %26 = vector.extract_strided_slice %3 {offsets = [2, 0], sizes = [1, 128], strides = [1, 1]} : vector<4x1024xf32> to vector<1x128xf32>
    %27 = vector.extract_strided_slice %3 {offsets = [2, 128], sizes = [1, 128], strides = [1, 1]} : vector<4x1024xf32> to vector<1x128xf32>
    %28 = vector.extract_strided_slice %3 {offsets = [2, 256], sizes = [1, 128], strides = [1, 1]} : vector<4x1024xf32> to vector<1x128xf32>
    %29 = vector.extract_strided_slice %3 {offsets = [2, 384], sizes = [1, 128], strides = [1, 1]} : vector<4x1024xf32> to vector<1x128xf32>
    %30 = vector.extract_strided_slice %3 {offsets = [2, 512], sizes = [1, 128], strides = [1, 1]} : vector<4x1024xf32> to vector<1x128xf32>
    %31 = vector.extract_strided_slice %3 {offsets = [2, 640], sizes = [1, 128], strides = [1, 1]} : vector<4x1024xf32> to vector<1x128xf32>
    %32 = vector.extract_strided_slice %3 {offsets = [2, 768], sizes = [1, 128], strides = [1, 1]} : vector<4x1024xf32> to vector<1x128xf32>
    %33 = vector.extract_strided_slice %3 {offsets = [2, 896], sizes = [1, 128], strides = [1, 1]} : vector<4x1024xf32> to vector<1x128xf32>
    %34 = tpu.concatenate %26, %27, %28, %29, %30, %31, %32, %33 in 0 : vector<1x128xf32>, vector<1x128xf32>, vector<1x128xf32>, vector<1x128xf32>, vector<1x128xf32>, vector<1x128xf32>, vector<1x128xf32>, vector<1x128xf32> -> vector<8x128xf32>
    %35 = vector.extract_strided_slice %34 {offsets = [0, 0], sizes = [8, 64], strides = [1, 1]} : vector<8x128xf32> to vector<8x64xf32>
    %36 = vector.extract_strided_slice %34 {offsets = [0, 64], sizes = [8, 64], strides = [1, 1]} : vector<8x128xf32> to vector<8x64xf32>
    %37 = vector.extract_strided_slice %3 {offsets = [3, 0], sizes = [1, 128], strides = [1, 1]} : vector<4x1024xf32> to vector<1x128xf32>
    %38 = vector.extract_strided_slice %3 {offsets = [3, 128], sizes = [1, 128], strides = [1, 1]} : vector<4x1024xf32> to vector<1x128xf32>
    %39 = vector.extract_strided_slice %3 {offsets = [3, 256], sizes = [1, 128], strides = [1, 1]} : vector<4x1024xf32> to vector<1x128xf32>
    %40 = vector.extract_strided_slice %3 {offsets = [3, 384], sizes = [1, 128], strides = [1, 1]} : vector<4x1024xf32> to vector<1x128xf32>
    %41 = vector.extract_strided_slice %3 {offsets = [3, 512], sizes = [1, 128], strides = [1, 1]} : vector<4x1024xf32> to vector<1x128xf32>
    %42 = vector.extract_strided_slice %3 {offsets = [3, 640], sizes = [1, 128], strides = [1, 1]} : vector<4x1024xf32> to vector<1x128xf32>
    %43 = vector.extract_strided_slice %3 {offsets = [3, 768], sizes = [1, 128], strides = [1, 1]} : vector<4x1024xf32> to vector<1x128xf32>
    %44 = vector.extract_strided_slice %3 {offsets = [3, 896], sizes = [1, 128], strides = [1, 1]} : vector<4x1024xf32> to vector<1x128xf32>
    %45 = tpu.concatenate %37, %38, %39, %40, %41, %42, %43, %44 in 0 : vector<1x128xf32>, vector<1x128xf32>, vector<1x128xf32>, vector<1x128xf32>, vector<1x128xf32>, vector<1x128xf32>, vector<1x128xf32>, vector<1x128xf32> -> vector<8x128xf32>
    %46 = vector.extract_strided_slice %45 {offsets = [0, 0], sizes = [8, 64], strides = [1, 1]} : vector<8x128xf32> to vector<8x64xf32>
    %47 = vector.extract_strided_slice %45 {offsets = [0, 64], sizes = [8, 64], strides = [1, 1]} : vector<8x128xf32> to vector<8x64xf32>
    %cst_4 = arith.constant 0.000000e+00 : f32
    %48 = vector.broadcast %cst_4 : f32 to vector<8x128xf32>
    %49 = arith.mulf %13, %24 : vector<8x64xf32>
    %50 = arith.mulf %14, %25 : vector<8x64xf32>
    %51 = arith.addf %49, %50 : vector<8x64xf32>
    %52 = arith.mulf %14, %24 : vector<8x64xf32>
    %53 = arith.mulf %13, %25 : vector<8x64xf32>
    %54 = arith.subf %52, %53 : vector<8x64xf32>
    %55 = arith.mulf %51, %51 : vector<8x64xf32>
    %56 = arith.mulf %54, %54 : vector<8x64xf32>
    %57 = arith.addf %55, %56 : vector<8x64xf32>
    %58 = math.sqrt %57 : vector<8x64xf32>
    %cst_5 = arith.constant 9.99999993E-9 : f32
    %59 = vector.broadcast %cst_5 : f32 to vector<8x64xf32>
    %60 = arith.addf %58, %59 : vector<8x64xf32>
    %61 = tpu.reciprocal %60 {approx = true} : vector<8x64xf32> -> vector<8x64xf32>
    %62 = arith.mulf %51, %61 : vector<8x64xf32>
    %c0_6 = arith.constant 0 : index
    %c0_7 = arith.constant 0 : index
    %63 = vector.load %arg3[%c0_6, %c0_7] : memref<768x128xf32, #tpu.memory_space<vmem>>, vector<64x128xf32>
    %cst_8 = arith.constant dense<0.000000e+00> : vector<8x128xf32>
    %64 = tpu.matmul %62, %63, %cst_8 {dimension_numbers = #tpu.dot_dimension_numbers<[1], [0], [0], [1], [0, 0, 1, 1], [], []>} : vector<8x64xf32>, vector<64x128xf32>, vector<8x128xf32> -> vector<8x128xf32>
    %65 = arith.addf %48, %64 : vector<8x128xf32>
    %66 = arith.mulf %54, %61 : vector<8x64xf32>
    %c64 = arith.constant 64 : index
    %c0_9 = arith.constant 0 : index
    %67 = vector.load %arg3[%c64, %c0_9] : memref<768x128xf32, #tpu.memory_space<vmem>>, vector<64x128xf32>
    %cst_10 = arith.constant dense<0.000000e+00> : vector<8x128xf32>
    %68 = tpu.matmul %66, %67, %cst_10 {dimension_numbers = #tpu.dot_dimension_numbers<[1], [0], [0], [1], [0, 0, 1, 1], [], []>} : vector<8x64xf32>, vector<64x128xf32>, vector<8x128xf32> -> vector<8x128xf32>
    %69 = arith.addf %65, %68 : vector<8x128xf32>
    %70 = arith.mulf %13, %35 : vector<8x64xf32>
    %71 = arith.mulf %14, %36 : vector<8x64xf32>
    %72 = arith.addf %70, %71 : vector<8x64xf32>
    %73 = arith.mulf %14, %35 : vector<8x64xf32>
    %74 = arith.mulf %13, %36 : vector<8x64xf32>
    %75 = arith.subf %73, %74 : vector<8x64xf32>
    %76 = arith.mulf %72, %72 : vector<8x64xf32>
    %77 = arith.mulf %75, %75 : vector<8x64xf32>
    %78 = arith.addf %76, %77 : vector<8x64xf32>
    %79 = math.sqrt %78 : vector<8x64xf32>
    %cst_11 = arith.constant 9.99999993E-9 : f32
    %80 = vector.broadcast %cst_11 : f32 to vector<8x64xf32>
    %81 = arith.addf %79, %80 : vector<8x64xf32>
    %82 = tpu.reciprocal %81 {approx = true} : vector<8x64xf32> -> vector<8x64xf32>
    %83 = arith.mulf %72, %82 : vector<8x64xf32>
    %c128 = arith.constant 128 : index
    %c0_12 = arith.constant 0 : index
    %84 = vector.load %arg3[%c128, %c0_12] : memref<768x128xf32, #tpu.memory_space<vmem>>, vector<64x128xf32>
    %cst_13 = arith.constant dense<0.000000e+00> : vector<8x128xf32>
    %85 = tpu.matmul %83, %84, %cst_13 {dimension_numbers = #tpu.dot_dimension_numbers<[1], [0], [0], [1], [0, 0, 1, 1], [], []>} : vector<8x64xf32>, vector<64x128xf32>, vector<8x128xf32> -> vector<8x128xf32>
    %86 = arith.addf %69, %85 : vector<8x128xf32>
    %87 = arith.mulf %75, %82 : vector<8x64xf32>
    %c192 = arith.constant 192 : index
    %c0_14 = arith.constant 0 : index
    %88 = vector.load %arg3[%c192, %c0_14] : memref<768x128xf32, #tpu.memory_space<vmem>>, vector<64x128xf32>
    %cst_15 = arith.constant dense<0.000000e+00> : vector<8x128xf32>
    %89 = tpu.matmul %87, %88, %cst_15 {dimension_numbers = #tpu.dot_dimension_numbers<[1], [0], [0], [1], [0, 0, 1, 1], [], []>} : vector<8x64xf32>, vector<64x128xf32>, vector<8x128xf32> -> vector<8x128xf32>
    %90 = arith.addf %86, %89 : vector<8x128xf32>
    %91 = arith.mulf %13, %46 : vector<8x64xf32>
    %92 = arith.mulf %14, %47 : vector<8x64xf32>
    %93 = arith.addf %91, %92 : vector<8x64xf32>
    %94 = arith.mulf %14, %46 : vector<8x64xf32>
    %95 = arith.mulf %13, %47 : vector<8x64xf32>
    %96 = arith.subf %94, %95 : vector<8x64xf32>
    %97 = arith.mulf %93, %93 : vector<8x64xf32>
    %98 = arith.mulf %96, %96 : vector<8x64xf32>
    %99 = arith.addf %97, %98 : vector<8x64xf32>
    %100 = math.sqrt %99 : vector<8x64xf32>
    %cst_16 = arith.constant 9.99999993E-9 : f32
    %101 = vector.broadcast %cst_16 : f32 to vector<8x64xf32>
    %102 = arith.addf %100, %101 : vector<8x64xf32>
    %103 = tpu.reciprocal %102 {approx = true} : vector<8x64xf32> -> vector<8x64xf32>
    %104 = arith.mulf %93, %103 : vector<8x64xf32>
    %c256 = arith.constant 256 : index
    %c0_17 = arith.constant 0 : index
    %105 = vector.load %arg3[%c256, %c0_17] : memref<768x128xf32, #tpu.memory_space<vmem>>, vector<64x128xf32>
    %cst_18 = arith.constant dense<0.000000e+00> : vector<8x128xf32>
    %106 = tpu.matmul %104, %105, %cst_18 {dimension_numbers = #tpu.dot_dimension_numbers<[1], [0], [0], [1], [0, 0, 1, 1], [], []>} : vector<8x64xf32>, vector<64x128xf32>, vector<8x128xf32> -> vector<8x128xf32>
    %107 = arith.addf %90, %106 : vector<8x128xf32>
    %108 = arith.mulf %96, %103 : vector<8x64xf32>
    %c320 = arith.constant 320 : index
    %c0_19 = arith.constant 0 : index
    %109 = vector.load %arg3[%c320, %c0_19] : memref<768x128xf32, #tpu.memory_space<vmem>>, vector<64x128xf32>
    %cst_20 = arith.constant dense<0.000000e+00> : vector<8x128xf32>
    %110 = tpu.matmul %108, %109, %cst_20 {dimension_numbers = #tpu.dot_dimension_numbers<[1], [0], [0], [1], [0, 0, 1, 1], [], []>} : vector<8x64xf32>, vector<64x128xf32>, vector<8x128xf32> -> vector<8x128xf32>
    %111 = arith.addf %107, %110 : vector<8x128xf32>
    %112 = arith.mulf %24, %35 : vector<8x64xf32>
    %113 = arith.mulf %25, %36 : vector<8x64xf32>
    %114 = arith.addf %112, %113 : vector<8x64xf32>
    %115 = arith.mulf %25, %35 : vector<8x64xf32>
    %116 = arith.mulf %24, %36 : vector<8x64xf32>
    %117 = arith.subf %115, %116 : vector<8x64xf32>
    %118 = arith.mulf %114, %114 : vector<8x64xf32>
    %119 = arith.mulf %117, %117 : vector<8x64xf32>
    %120 = arith.addf %118, %119 : vector<8x64xf32>
    %121 = math.sqrt %120 : vector<8x64xf32>
    %cst_21 = arith.constant 9.99999993E-9 : f32
    %122 = vector.broadcast %cst_21 : f32 to vector<8x64xf32>
    %123 = arith.addf %121, %122 : vector<8x64xf32>
    %124 = tpu.reciprocal %123 {approx = true} : vector<8x64xf32> -> vector<8x64xf32>
    %125 = arith.mulf %114, %124 : vector<8x64xf32>
    %c384 = arith.constant 384 : index
    %c0_22 = arith.constant 0 : index
    %126 = vector.load %arg3[%c384, %c0_22] : memref<768x128xf32, #tpu.memory_space<vmem>>, vector<64x128xf32>
    %cst_23 = arith.constant dense<0.000000e+00> : vector<8x128xf32>
    %127 = tpu.matmul %125, %126, %cst_23 {dimension_numbers = #tpu.dot_dimension_numbers<[1], [0], [0], [1], [0, 0, 1, 1], [], []>} : vector<8x64xf32>, vector<64x128xf32>, vector<8x128xf32> -> vector<8x128xf32>
    %128 = arith.addf %111, %127 : vector<8x128xf32>
    %129 = arith.mulf %117, %124 : vector<8x64xf32>
    %c448 = arith.constant 448 : index
    %c0_24 = arith.constant 0 : index
    %130 = vector.load %arg3[%c448, %c0_24] : memref<768x128xf32, #tpu.memory_space<vmem>>, vector<64x128xf32>
    %cst_25 = arith.constant dense<0.000000e+00> : vector<8x128xf32>
    %131 = tpu.matmul %129, %130, %cst_25 {dimension_numbers = #tpu.dot_dimension_numbers<[1], [0], [0], [1], [0, 0, 1, 1], [], []>} : vector<8x64xf32>, vector<64x128xf32>, vector<8x128xf32> -> vector<8x128xf32>
    %132 = arith.addf %128, %131 : vector<8x128xf32>
    %133 = arith.mulf %24, %46 : vector<8x64xf32>
    %134 = arith.mulf %25, %47 : vector<8x64xf32>
    %135 = arith.addf %133, %134 : vector<8x64xf32>
    %136 = arith.mulf %25, %46 : vector<8x64xf32>
    %137 = arith.mulf %24, %47 : vector<8x64xf32>
    %138 = arith.subf %136, %137 : vector<8x64xf32>
    %139 = arith.mulf %135, %135 : vector<8x64xf32>
    %140 = arith.mulf %138, %138 : vector<8x64xf32>
    %141 = arith.addf %139, %140 : vector<8x64xf32>
    %142 = math.sqrt %141 : vector<8x64xf32>
    %cst_26 = arith.constant 9.99999993E-9 : f32
    %143 = vector.broadcast %cst_26 : f32 to vector<8x64xf32>
    %144 = arith.addf %142, %143 : vector<8x64xf32>
    %145 = tpu.reciprocal %144 {approx = true} : vector<8x64xf32> -> vector<8x64xf32>
    %146 = arith.mulf %135, %145 : vector<8x64xf32>
    %c512 = arith.constant 512 : index
    %c0_27 = arith.constant 0 : index
    %147 = vector.load %arg3[%c512, %c0_27] : memref<768x128xf32, #tpu.memory_space<vmem>>, vector<64x128xf32>
    %cst_28 = arith.constant dense<0.000000e+00> : vector<8x128xf32>
    %148 = tpu.matmul %146, %147, %cst_28 {dimension_numbers = #tpu.dot_dimension_numbers<[1], [0], [0], [1], [0, 0, 1, 1], [], []>} : vector<8x64xf32>, vector<64x128xf32>, vector<8x128xf32> -> vector<8x128xf32>
    %149 = arith.addf %132, %148 : vector<8x128xf32>
    %150 = arith.mulf %138, %145 : vector<8x64xf32>
    %c576 = arith.constant 576 : index
    %c0_29 = arith.constant 0 : index
    %151 = vector.load %arg3[%c576, %c0_29] : memref<768x128xf32, #tpu.memory_space<vmem>>, vector<64x128xf32>
    %cst_30 = arith.constant dense<0.000000e+00> : vector<8x128xf32>
    %152 = tpu.matmul %150, %151, %cst_30 {dimension_numbers = #tpu.dot_dimension_numbers<[1], [0], [0], [1], [0, 0, 1, 1], [], []>} : vector<8x64xf32>, vector<64x128xf32>, vector<8x128xf32> -> vector<8x128xf32>
    %153 = arith.addf %149, %152 : vector<8x128xf32>
    %154 = arith.mulf %35, %46 : vector<8x64xf32>
    %155 = arith.mulf %36, %47 : vector<8x64xf32>
    %156 = arith.addf %154, %155 : vector<8x64xf32>
    %157 = arith.mulf %36, %46 : vector<8x64xf32>
    %158 = arith.mulf %35, %47 : vector<8x64xf32>
    %159 = arith.subf %157, %158 : vector<8x64xf32>
    %160 = arith.mulf %156, %156 : vector<8x64xf32>
    %161 = arith.mulf %159, %159 : vector<8x64xf32>
    %162 = arith.addf %160, %161 : vector<8x64xf32>
    %163 = math.sqrt %162 : vector<8x64xf32>
    %cst_31 = arith.constant 9.99999993E-9 : f32
    %164 = vector.broadcast %cst_31 : f32 to vector<8x64xf32>
    %165 = arith.addf %163, %164 : vector<8x64xf32>
    %166 = tpu.reciprocal %165 {approx = true} : vector<8x64xf32> -> vector<8x64xf32>
    %167 = arith.mulf %156, %166 : vector<8x64xf32>
    %c640 = arith.constant 640 : index
    %c0_32 = arith.constant 0 : index
    %168 = vector.load %arg3[%c640, %c0_32] : memref<768x128xf32, #tpu.memory_space<vmem>>, vector<64x128xf32>
    %cst_33 = arith.constant dense<0.000000e+00> : vector<8x128xf32>
    %169 = tpu.matmul %167, %168, %cst_33 {dimension_numbers = #tpu.dot_dimension_numbers<[1], [0], [0], [1], [0, 0, 1, 1], [], []>} : vector<8x64xf32>, vector<64x128xf32>, vector<8x128xf32> -> vector<8x128xf32>
    %170 = arith.addf %153, %169 : vector<8x128xf32>
    %171 = arith.mulf %159, %166 : vector<8x64xf32>
    %c704 = arith.constant 704 : index
    %c0_34 = arith.constant 0 : index
    %172 = vector.load %arg3[%c704, %c0_34] : memref<768x128xf32, #tpu.memory_space<vmem>>, vector<64x128xf32>
    %cst_35 = arith.constant dense<0.000000e+00> : vector<8x128xf32>
    %173 = tpu.matmul %171, %172, %cst_35 {dimension_numbers = #tpu.dot_dimension_numbers<[1], [0], [0], [1], [0, 0, 1, 1], [], []>} : vector<8x64xf32>, vector<64x128xf32>, vector<8x128xf32> -> vector<8x128xf32>
    %174 = arith.addf %170, %173 : vector<8x128xf32>
    %c0_36 = arith.constant 0 : index
    %c0_37 = arith.constant 0 : index
    %175 = vector.load %arg4[%c0_36, %c0_37] : memref<1x128xf32, #tpu.memory_space<vmem>>, vector<1x128xf32>
    %176 = vector.broadcast %175 : vector<1x128xf32> to vector<8x128xf32>
    %177 = arith.addf %174, %176 : vector<8x128xf32>
    %c0_38 = arith.constant 0 : index
    %c0_39 = arith.constant 0 : index
    %c0_40 = arith.constant 0 : index
    %178 = vector.load %arg5[%c0_38, %c0_39, %c0_40] : memref<1x8x128xf32, #tpu.memory_space<vmem>>, vector<1x8x128xf32>
    %179 = vector.shape_cast %178 : vector<1x8x128xf32> to vector<8x128xf32>
    %180 = vector.shape_cast %177 : vector<8x128xf32> to vector<1x8x128xf32>
    tpu.vector_store %arg5[%c0_38, %c0_39, %c0_40], %180 {strides = array<i32>} : memref<1x8x128xf32, #tpu.memory_space<vmem>>, vector<1x8x128xf32>,
    return
  }
  func.func @transform_0(%arg0: i32) -> (i32, i32, i32) {
    %c0_i32 = arith.constant 0 : i32
    %c0_i32_0 = arith.constant 0 : i32
    %c0_i32_1 = arith.constant 0 : i32
    return %arg0, %c0_i32, %c0_i32_0 : i32, i32, i32
  }
  func.func @transform_1(%arg0: i32) -> (i32, i32) {
    %c0_i32 = arith.constant 0 : i32
    %c0_i32_0 = arith.constant 0 : i32
    %c0_i32_1 = arith.constant 0 : i32
    return %c0_i32, %c0_i32_0 : i32, i32
  }
  func.func @transform_2(%arg0: i32) -> (i32, i32) {
    %c0_i32 = arith.constant 0 : i32
    %c0_i32_0 = arith.constant 0 : i32
    %c0_i32_1 = arith.constant 0 : i32
    return %c0_i32, %c0_i32_0 : i32, i32
  }
  func.func @transform_3(%arg0: i32) -> (i32, i32) {
    %c0_i32 = arith.constant 0 : i32
    %c0_i32_0 = arith.constant 0 : i32
    %c0_i32_1 = arith.constant 0 : i32
    return %c0_i32, %c0_i32_0 : i32, i32
  }
  func.func @transform_4(%arg0: i32) -> (i32, i32, i32) {
    %c0_i32 = arith.constant 0 : i32
    %c0_i32_0 = arith.constant 0 : i32
    %c0_i32_1 = arith.constant 0 : i32
    return %arg0, %c0_i32, %c0_i32_0 : i32, i32, i32
  }
}

</mosaic_0001>

<llo_original>
// kernel: mac_gcc_doa_forward.1
$region0: #{mac_gcc_doa_forward.1}
  #allocation0 [shape = 'u32[]', space=smem, size = 0x4, offset = 0x4, fixed_abs, tag = 'smem constant byte address 0x4 - core index']
  #allocation1 [shape = 'u32[144,128]{1,0:T(1,128)}', space=vmem, size = 0x12000, scoped, tag = 'internal scratch']
  %s0 = inlined_call_operand.hbm [shape: f32[2,4,288], index: 0, kind: input, shape index: {}]
  %s1 = inlined_call_operand.hbm [shape: f32[288,1024], index: 1, kind: input, shape index: {}]
  %s2 = inlined_call_operand.hbm [shape: f32[768,128], index: 2, kind: input, shape index: {}]
  %s3 = inlined_call_operand.hbm [shape: f32[1,128], index: 3, kind: input, shape index: {}]
  %s4 = inlined_call_operand.vmem [shape: f32[2,8,128], index: 4, kind: output, shape index: {}]
  %s5 = sld [smem:[#allocation0]]
  $region65: #{mac_gcc_doa_forward.1} parent=0
    _
  %s7 = ssub.s32 1, %s5
  %s8 = scalar_select 0, %s7, %s5
  $region1: #{mac_gcc_doa_forward.1} parent=0
    #allocation2 [shape = 'u8[12288]{0}', space=vmem, size = 0x3000, scoped, tag = 'input window, operand 0']
    #allocation3 [shape = 's32[2]{0}', space=sflag, size = 0x8, scoped, tag = 'scoped memory for mac_gcc_doa_forward.1']
    #allocation4 [shape = 'u8[1179648]{0}', space=vmem, size = 0x120000, scoped, tag = 'input window, operand 1, single buffered']
    #allocation5 [shape = 's32[1]{0}', space=sflag, size = 0x4, scoped, tag = 'scoped memory for mac_gcc_doa_forward.1']
    #allocation6 [shape = 'u8[393216]{0}', space=vmem, size = 0x60000, scoped, tag = 'input window, operand 2, single buffered']
    #allocation7 [shape = 'u8[512]{0}', space=vmem, size = 0x400, scoped, tag = 'input window, operand 3, single buffered']
    #allocation8 [shape = 's32[1]{0}', space=sflag, size = 0x4, scoped, tag = 'scoped memory for mac_gcc_doa_forward.1']
    %9 = vsyncpa [#allocation3], 0
    %s10 = scalar_lea.sflag [#allocation3], 1
    %11 = vsyncpa %s10, 0
    %12 = vsyncpa [#allocation5], 0
    %13 = vsyncpa [#allocation8], 0
    loop: start=0, step=1, limit=4
    $region2: #{mac_gcc_doa_forward.1} parent=1 // loop_pre_header
      _
    $region3: #{mac_gcc_doa_forward.1} parent=1 // loop_header
      %s15 = sphi 0, %s19
      %p16 = scmp.ge.s32.totalorder %s15, 4
      %s25 = sphi 0, %s27
      %s28 = sphi 0, %s25
      %s29 = sphi 0, %s28
      %s45 = sphi 0, %s29
      %s49 = sphi 0, %s49
      %s51 = sphi 0, %s49
      %s52 = sphi 0, %s51
      %s66 = sphi 0, %s52
      %s70 = sphi 0, %s70
      %s72 = sphi 0, %s70
      %s73 = sphi 0, %s72
      %s87 = sphi 0, %s73
      %s91 = sphi 0, %s91
      %s93 = sphi 0, %s91
      %s94 = sphi 0, %s93
      %s108 = sphi 0, %s94
      %s114 = sphi 0, %s116
      %s117 = sphi 0, %s114
      %s118 = sphi 0, %s117
      %s134 = sphi 0, %s118
    $region4: #{mac_gcc_doa_forward.1} parent=1 // loop_header_branch
      %18 = sbr.rel (%p16) target = $region8
    $region5: #{mac_gcc_doa_forward.1} parent=1 // loop_body
      %s20 = ssub.s32 %s15, 1
      %s21 = ssub.s32 %s15, 2
      %s22 = sadd.s32 %s15, 1
      %s23 = ssub.s32 %s15, %s22
      %p24 = scmp.eq.s32.totalorder %s23, 0
      %s26 = sadd.s32 %s25, 1
      %s27 = scalar_select %p24, %s25, %s26
      %p30 = pneg %p24
      %p31 = scmp.eq.s32.totalorder %s15, 1
      %p32 = por %p30, %p31
      %p33 = scmp.ne.s32.totalorder %s25, %s28
      %p34 = scmp.eq.s32.totalorder %s15, 0
      %p35 = por %p33, %p34
      %p36 = scmp.ne.s32.totalorder %s25, %s28
      %p37 = scmp.eq.s32.totalorder %s20, 1
      %p38 = por %p36, %p37
      %p39 = scmp.ne.s32.totalorder %s28, %s29
      %p40 = scmp.eq.s32.totalorder %s20, 0
      %p41 = por %p39, %p40
      %p42 = scmp.ne.s32.totalorder %s28, %s29
      %p43 = scmp.eq.s32.totalorder %s21, 1
      %p44 = por %p42, %p43
      %p46 = scmp.ne.s32.totalorder %s29, %s45
      %p47 = scmp.eq.s32.totalorder %s21, 0
      %p48 = por %p46, %p47
      %s50 = sadd.s32 %s49, 1
      %p53 = scmp.eq.s32.totalorder %s15, 1
      %p54 = scmp.ne.s32.totalorder %s49, %s51
      %p55 = scmp.eq.s32.totalorder %s15, 0
      %p56 = por %p54, %p55
      %p57 = scmp.ne.s32.totalorder %s49, %s51
      %p58 = scmp.eq.s32.totalorder %s20, 1
      %p59 = por %p57, %p58
      %p60 = scmp.ne.s32.totalorder %s51, %s52
      %p61 = scmp.eq.s32.totalorder %s20, 0
      %p62 = por %p60, %p61
      %p63 = scmp.ne.s32.totalorder %s51, %s52
      %p64 = scmp.eq.s32.totalorder %s21, 1
      %p65 = por %p63, %p64
      %p67 = scmp.ne.s32.totalorder %s52, %s66
      %p68 = scmp.eq.s32.totalorder %s21, 0
      %p69 = por %p67, %p68
      %s71 = sadd.s32 %s70, 1
      %p74 = scmp.eq.s32.totalorder %s15, 1
      %p75 = scmp.ne.s32.totalorder %s70, %s72
      %p76 = scmp.eq.s32.totalorder %s15, 0
      %p77 = por %p75, %p76
      %p78 = scmp.ne.s32.totalorder %s70, %s72
      %p79 = scmp.eq.s32.totalorder %s20, 1
      %p80 = por %p78, %p79
      %p81 = scmp.ne.s32.totalorder %s72, %s73
      %p82 = scmp.eq.s32.totalorder %s20, 0
      %p83 = por %p81, %p82
      %p84 = scmp.ne.s32.totalorder %s72, %s73
      %p85 = scmp.eq.s32.totalorder %s21, 1
      %p86 = por %p84, %p85
      %p88 = scmp.ne.s32.totalorder %s73, %s87
      %p89 = scmp.eq.s32.totalorder %s21, 0
      %p90 = por %p88, %p89
      %s92 = sadd.s32 %s91, 1
      %p95 = scmp.eq.s32.totalorder %s15, 1
      %p96 = scmp.ne.s32.totalorder %s91, %s93
      %p97 = scmp.eq.s32.totalorder %s15, 0
      %p98 = por %p96, %p97
      %p99 = scmp.ne.s32.totalorder %s91, %s93
      %p100 = scmp.eq.s32.totalorder %s20, 1
      %p101 = por %p99, %p100
      %p102 = scmp.ne.s32.totalorder %s93, %s94
      %p103 = scmp.eq.s32.totalorder %s20, 0
      %p104 = por %p102, %p103
      %p105 = scmp.ne.s32.totalorder %s93, %s94
      %p106 = scmp.eq.s32.totalorder %s21, 1
      %p107 = por %p105, %p106
      %p109 = scmp.ne.s32.totalorder %s94, %s108
      %p110 = scmp.eq.s32.totalorder %s21, 0
      %p111 = por %p109, %p110
      %s112 = ssub.s32 %s15, %s22
      %p113 = scmp.eq.s32.totalorder %s112, 0
      %s115 = sadd.s32 %s114, 1
      %s116 = scalar_select %p113, %s114, %s115
      %p119 = pneg %p113
      %p120 = scmp.eq.s32.totalorder %s15, 1
      %p121 = por %p119, %p120
      %p122 = scmp.ne.s32.totalorder %s114, %s117
      %p123 = scmp.eq.s32.totalorder %s15, 0
      %p124 = por %p122, %p123
      %p125 = scmp.ne.s32.totalorder %s114, %s117
      %p126 = scmp.eq.s32.totalorder %s20, 1
      %p127 = por %p125, %p126
      %p128 = scmp.ne.s32.totalorder %s117, %s118
      %p129 = scmp.eq.s32.totalorder %s20, 0
      %p130 = por %p128, %p129
      %p131 = scmp.ne.s32.totalorder %s117, %s118
      %p132 = scmp.eq.s32.totalorder %s21, 1
      %p133 = por %p131, %p132
      %p135 = scmp.ne.s32.totalorder %s118, %s134
      %p136 = scmp.eq.s32.totalorder %s21, 0
      %p137 = por %p135, %p136
      %p138 = scmp.le.s32.totalorder 1, %s15
      %p139 = scmp.lt.s32.totalorder %s15, 3
      %p140 = pnand %p138, %p139
      %p141 = pneg %p140
      // Predicated region
      $region9: #{mac_gcc_doa_forward.1} parent=5 // pred_check
        _
      $region10: #{mac_gcc_doa_forward.1} parent=5 // pred_check_branch
        %143 = sbr.rel (%p140) target = $region12
      $region11: #{mac_gcc_doa_forward.1} parent=5 // pred_region
        %s144 = ssub.s32 %s15, 1
        // Predicated region
        $region13: #{mac_gcc_doa_forward.1} parent=11 // pred_check
          %p145 = pneg %p62
        $region14: #{mac_gcc_doa_forward.1} parent=11 // pred_check_branch
          %147 = sbr.rel (%p145) target = $region16
        $region15: #{mac_gcc_doa_forward.1} parent=11 // pred_region
          %s149 = ssub.s32 36864, 36864
          %150 = vsyncadd [#allocation5], %s149
          %s151 = sshll.u32 [#allocation4], 4
          %s152 = int_to_ptr.vmem [resolvable:$true] %s151
          %157 = dma.hbm_to_vmem [thread:$0]  %s1, 36864, %s152, [#allocation5], 1024, 1024, 64
        $region16: #{mac_gcc_doa_forward.1} parent=11 // pred_fallthru
          _
        // Predicated region
        $region17: #{mac_gcc_doa_forward.1} parent=11 // pred_check
          %p158 = pneg %p83
        $region18: #{mac_gcc_doa_forward.1} parent=11 // pred_check_branch
          %160 = sbr.rel (%p158) target = $region20
        $region19: #{mac_gcc_doa_forward.1} parent=11 // pred_region
          %s162 = ssub.s32 12288, 12288
          %163 = vsyncadd [#allocation5], %s162
          %s164 = sshll.u32 [#allocation6], 4
          %s165 = int_to_ptr.vmem [resolvable:$true] %s164
          %170 = dma.hbm_to_vmem [thread:$0]  %s2, 12288, %s165, [#allocation5], 128, 128, 8
        $region20: #{mac_gcc_doa_forward.1} parent=11 // pred_fallthru
          _
        // Predicated region
        $region21: #{mac_gcc_doa_forward.1} parent=11 // pred_check
          %p171 = pneg %p104
        $region22: #{mac_gcc_doa_forward.1} parent=11 // pred_check_branch
          %173 = sbr.rel (%p171) target = $region24
        $region23: #{mac_gcc_doa_forward.1} parent=11 // pred_region
          %s175 = ssub.s32 16, 16
          %176 = vsyncadd [#allocation8], %s175
          %s178 = sshll.u32 [#allocation7], 4
          %s179 = int_to_ptr.vmem [resolvable:$true] %s178
          %181 = dma.hbm_to_vmem [thread:$0]  %s3, 16, %s179, [#allocation8]
        $region24: #{mac_gcc_doa_forward.1} parent=11 // pred_fallthru
          _
      $region12: #{mac_gcc_doa_forward.1} parent=5 // pred_fallthru
        _
      %p182 = scmp.lt.s32.totalorder %s15, 2
      // Predicated region
      $region25: #{mac_gcc_doa_forward.1} parent=5 // pred_check
        %p183 = pneg %p182
      $region26: #{mac_gcc_doa_forward.1} parent=5 // pred_check_branch
        %185 = sbr.rel (%p183) target = $region28
      $region27: #{mac_gcc_doa_forward.1} parent=5 // pred_region
        // Predicated region
        $region29: #{mac_gcc_doa_forward.1} parent=27 // pred_check
          %p186 = pneg %p35
        $region30: #{mac_gcc_doa_forward.1} parent=27 // pred_check_branch
          %188 = sbr.rel (%p186) target = $region32
        $region31: #{mac_gcc_doa_forward.1} parent=27 // pred_region
          %s189 = sand.u32 %s25, 1
          %s190 = scalar_lea.sflag [#allocation3], %s189
          %s191 = sand.u32 %s25, 1
          %s192 = smul.addr %s191, 12
          %s193 = scalar_lea.vmem [#allocation2], %s192
          %s195 = ssub.s32 192, 192
          %196 = vsyncadd %s190, %s195
          %s197 = smul.addr %s15, 3
          %s198 = smul.addr %s197, 64
          %s199 = scalar_lea.hbm %s0, %s198
          %s201 = sshll.u32 %s193, 4
          %s202 = int_to_ptr.vmem [resolvable:$true] %s201
          %204 = dma.hbm_to_vmem [thread:$0]  %s199, 192, %s202, %s190
        $region32: #{mac_gcc_doa_forward.1} parent=27 // pred_fallthru
          _
      $region28: #{mac_gcc_doa_forward.1} parent=5 // pred_fallthru
        _
      %p205 = scmp.le.s32.totalorder 1, %s15
      %p206 = scmp.lt.s32.totalorder %s15, 3
      %p207 = pnand %p205, %p206
      %p208 = pneg %p207
      // Predicated region
      $region33: #{mac_gcc_doa_forward.1} parent=5 // pred_check
        _
      $region34: #{mac_gcc_doa_forward.1} parent=5 // pred_check_branch
        %210 = sbr.rel (%p207) target = $region36
      $region35: #{mac_gcc_doa_forward.1} parent=5 // pred_region
        %s211 = ssub.s32 %s15, 1
        %s212 = sand.u32 %s28, 1
        %s213 = scalar_lea.sflag [#allocation3], %s212
        %s214 = sand.u32 %s28, 1
        %s215 = smul.addr %s214, 12
        %s216 = scalar_lea.vmem [#allocation2], %s215
        // Predicated region
        $region37: #{mac_gcc_doa_forward.1} parent=35 // pred_check
          %p217 = pneg %p41
        $region38: #{mac_gcc_doa_forward.1} parent=35 // pred_check_branch
          %219 = sbr.rel (%p217) target = $region40
        $region39: #{mac_gcc_doa_forward.1} parent=35 // pred_region
          %220 = dma.done %s213, 192
        $region40: #{mac_gcc_doa_forward.1} parent=35 // pred_fallthru
          _
        // Predicated region
        $region41: #{mac_gcc_doa_forward.1} parent=35 // pred_check
          %p221 = pneg %p62
        $region42: #{mac_gcc_doa_forward.1} parent=35 // pred_check_branch
          %223 = sbr.rel (%p221) target = $region44
        $region43: #{mac_gcc_doa_forward.1} parent=35 // pred_region
          %224 = dma.done [#allocation5], 36864
        $region44: #{mac_gcc_doa_forward.1} parent=35 // pred_fallthru
          _
        // Predicated region
        $region45: #{mac_gcc_doa_forward.1} parent=35 // pred_check
          %p225 = pneg %p83
        $region46: #{mac_gcc_doa_forward.1} parent=35 // pred_check_branch
          %227 = sbr.rel (%p225) target = $region48
        $region47: #{mac_gcc_doa_forward.1} parent=35 // pred_region
          %228 = dma.done [#allocation5], 12288
        $region48: #{mac_gcc_doa_forward.1} parent=35 // pred_fallthru
          _
        // Predicated region
        $region49: #{mac_gcc_doa_forward.1} parent=35 // pred_check
          %p229 = pneg %p104
        $region50: #{mac_gcc_doa_forward.1} parent=35 // pred_check_branch
          %231 = sbr.rel (%p229) target = $region52
        $region51: #{mac_gcc_doa_forward.1} parent=35 // pred_region
          %232 = dma.done [#allocation8], 16
        $region52: #{mac_gcc_doa_forward.1} parent=35 // pred_fallthru
          _
        %s233 = sand.u32 %s28, 1
        %s234 = scalar_lea.sflag [#allocation3], %s233
        %s235 = sand.u32 %s28, 1
        %s236 = smul.addr %s235, 12
        %s237 = scalar_lea.vmem [#allocation2], %s236
        %p238 = pneg %p41
        %p239 = pneg %p38
        %p240 = pneg %p62
        %p241 = pneg %p59
        %p242 = pneg %p83
        %p243 = pneg %p80
        %p244 = pneg %p104
        %p245 = pneg %p101
        %p246 = pneg %p130
        %p247 = pneg %p127
        %p248 = scmp.lt.s32.totalorder %s20, 1
        %s249 = scalar_select %p248, %s20, 1
        %s250 = smul.addr %s249, 8
        %s251 = scalar_lea.vmem %s4, %s250
        %p252 = scmp.lt.s32.totalorder %s20, 1
        %s253 = scalar_select %p252, %s20, 1
        %s254 = smul.addr %s253, 8
        %s255 = scalar_lea.vmem %s4, %s254
        %v256 = vld [vmem:[%s216] sm:$0xff]
        %v257 = vld [vmem:[%s216 + $0x8] sm:$0xf]
        %v258 = vld [vmem:[#allocation4] sm:$0xff]
        %v259 = vld [vmem:[#allocation4 + $0x8] sm:$0xff]
        %v260 = vld [vmem:[#allocation4 + $0x10] sm:$0xff]
        %v261 = vld [vmem:[#allocation4 + $0x18] sm:$0xff]
        %v262 = vld [vmem:[#allocation4 + $0x20] sm:$0xff]
        %v263 = vld [vmem:[#allocation4 + $0x28] sm:$0xff]
        %v264 = vld [vmem:[#allocation4 + $0x30] sm:$0xff]
        %v265 = vld [vmem:[#allocation4 + $0x38] sm:$0xff]
        %v266 = vld [vmem:[#allocation4 + $0x40] sm:$0xff]
        %v267 = vld [vmem:[#allocation4 + $0x48] sm:$0xff]
        %v268 = vld [vmem:[#allocation4 + $0x50] sm:$0xff]
        %v269 = vld [vmem:[#allocation4 + $0x58] sm:$0xff]
        %v270 = vld [vmem:[#allocation4 + $0x60] sm:$0xff]
        %v271 = vld [vmem:[#allocation4 + $0x68] sm:$0xff]
        %v272 = vld [vmem:[#allocation4 + $0x70] sm:$0xff]
        %v273 = vld [vmem:[#allocation4 + $0x78] sm:$0xff]
        %v274 = vld [vmem:[#allocation4 + $0x80] sm:$0xff]
        %v275 = vld [vmem:[#allocation4 + $0x88] sm:$0xff]
        %v276 = vld [vmem:[#allocation4 + $0x90] sm:$0xff]
        %v277 = vld [vmem:[#allocation4 + $0x98] sm:$0xff]
        %v278 = vld [vmem:[#allocation4 + $0xa0] sm:$0xff]
        %v279 = vld [vmem:[#allocation4 + $0xa8] sm:$0xff]
        %v280 = vld [vmem:[#allocation4 + $0xb0] sm:$0xff]
        %v281 = vld [vmem:[#allocation4 + $0xb8] sm:$0xff]
        %v282 = vld [vmem:[#allocation4 + $0xc0] sm:$0xff]
        %v283 = vld [vmem:[#allocation4 + $0xc8] sm:$0xff]
        %v284 = vld [vmem:[#allocation4 + $0xd0] sm:$0xff]
        %v285 = vld [vmem:[#allocation4 + $0xd8] sm:$0xff]
        %v286 = vld [vmem:[#allocation4 + $0xe0] sm:$0xff]
        %v287 = vld [vmem:[#allocation4 + $0xe8] sm:$0xff]
        %v288 = vld [vmem:[#allocation4 + $0xf0] sm:$0xff]
        %v289 = vld [vmem:[#allocation4 + $0xf8] sm:$0xff]
        %v290 = vld [vmem:[#allocation4 + $0x100] sm:$0xff]
        %v291 = vld [vmem:[#allocation4 + $0x108] sm:$0xff]
        %v292 = vld [vmem:[#allocation4 + $0x110] sm:$0xff]
        %v293 = vld [vmem:[#allocation4 + $0x118] sm:$0xff]
        %v294 = vld [vmem:[#allocation4 + $0x120] sm:$0xff]
        %v295 = vld [vmem:[#allocation4 + $0x128] sm:$0xff]
        %v296 = vld [vmem:[#allocation4 + $0x130] sm:$0xff]
        %v297 = vld [vmem:[#allocation4 + $0x138] sm:$0xff]
        %v298 = vld [vmem:[#allocation4 + $0x140] sm:$0xff]
        %v299 = vld [vmem:[#allocation4 + $0x148] sm:$0xff]
        %v300 = vld [vmem:[#allocation4 + $0x150] sm:$0xff]
        %v301 = vld [vmem:[#allocation4 + $0x158] sm:$0xff]
        %v302 = vld [vmem:[#allocation4 + $0x160] sm:$0xff]
        %v303 = vld [vmem:[#allocation4 + $0x168] sm:$0xff]
        %v304 = vld [vmem:[#allocation4 + $0x170] sm:$0xff]
        %v305 = vld [vmem:[#allocation4 + $0x178] sm:$0xff]
        %v306 = vld [vmem:[#allocation4 + $0x180] sm:$0xff]
        %v307 = vld [vmem:[#allocation4 + $0x188] sm:$0xff]
        %v308 = vld [vmem:[#allocation4 + $0x190] sm:$0xff]
        %v309 = vld [vmem:[#allocation4 + $0x198] sm:$0xff]
        %v310 = vld [vmem:[#allocation4 + $0x1a0] sm:$0xff]
        %v311 = vld [vmem:[#allocation4 + $0x1a8] sm:$0xff]
        %v312 = vld [vmem:[#allocation4 + $0x1b0] sm:$0xff]
        %v313 = vld [vmem:[#allocation4 + $0x1b8] sm:$0xff]
        %v314 = vld [vmem:[#allocation4 + $0x1c0] sm:$0xff]
        %v315 = vld [vmem:[#allocation4 + $0x1c8] sm:$0xff]
        %v316 = vld [vmem:[#allocation4 + $0x1d0] sm:$0xff]
        %v317 = vld [vmem:[#allocation4 + $0x1d8] sm:$0xff]
        %v318 = vld [vmem:[#allocation4 + $0x1e0] sm:$0xff]
        %v319 = vld [vmem:[#allocation4 + $0x1e8] sm:$0xff]
        %v320 = vld [vmem:[#allocation4 + $0x1f0] sm:$0xff]
        %v321 = vld [vmem:[#allocation4 + $0x1f8] sm:$0xff]
        %v322 = vld [vmem:[#allocation4 + $0x200] sm:$0xff]
        %v323 = vld [vmem:[#allocation4 + $0x208] sm:$0xff]
        %v324 = vld [vmem:[#allocation4 + $0x210] sm:$0xff]
        %v325 = vld [vmem:[#allocation4 + $0x218] sm:$0xff]
        %v326 = vld [vmem:[#allocation4 + $0x220] sm:$0xff]
        %v327 = vld [vmem:[#allocation4 + $0x228] sm:$0xff]
        %v328 = vld [vmem:[#allocation4 + $0x230] sm:$0xff]
        %v329 = vld [vmem:[#allocation4 + $0x238] sm:$0xff]
        %v330 = vld [vmem:[#allocation4 + $0x240] sm:$0xff]
        %v331 = vld [vmem:[#allocation4 + $0x248] sm:$0xff]
        %v332 = vld [vmem:[#allocation4 + $0x250] sm:$0xff]
        %v333 = vld [vmem:[#allocation4 + $0x258] sm:$0xff]
        %v334 = vld [vmem:[#allocation4 + $0x260] sm:$0xff]
        %v335 = vld [vmem:[#allocation4 + $0x268] sm:$0xff]
        %v336 = vld [vmem:[#allocation4 + $0x270] sm:$0xff]
        %v337 = vld [vmem:[#allocation4 + $0x278] sm:$0xff]
        %v338 = vld [vmem:[#allocation4 + $0x280] sm:$0xff]
        %v339 = vld [vmem:[#allocation4 + $0x288] sm:$0xff]
        %v340 = vld [vmem:[#allocation4 + $0x290] sm:$0xff]
        %v341 = vld [vmem:[#allocation4 + $0x298] sm:$0xff]
        %v342 = vld [vmem:[#allocation4 + $0x2a0] sm:$0xff]
        %v343 = vld [vmem:[#allocation4 + $0x2a8] sm:$0xff]
        %v344 = vld [vmem:[#allocation4 + $0x2b0] sm:$0xff]
        %v345 = vld [vmem:[#allocation4 + $0x2b8] sm:$0xff]
        %v346 = vld [vmem:[#allocation4 + $0x2c0] sm:$0xff]
        %v347 = vld [vmem:[#allocation4 + $0x2c8] sm:$0xff]
        %v348 = vld [vmem:[#allocation4 + $0x2d0] sm:$0xff]
        %v349 = vld [vmem:[#allocation4 + $0x2d8] sm:$0xff]
        %v350 = vld [vmem:[#allocation4 + $0x2e0] sm:$0xff]
        %v351 = vld [vmem:[#allocation4 + $0x2e8] sm:$0xff]
        %v352 = vld [vmem:[#allocation4 + $0x2f0] sm:$0xff]
        %v353 = vld [vmem:[#allocation4 + $0x2f8] sm:$0xff]
        %v354 = vld [vmem:[#allocation4 + $0x300] sm:$0xff]
        %v355 = vld [vmem:[#allocation4 + $0x308] sm:$0xff]
        %v356 = vld [vmem:[#allocation4 + $0x310] sm:$0xff]
        %v357 = vld [vmem:[#allocation4 + $0x318] sm:$0xff]
        %v358 = vld [vmem:[#allocation4 + $0x320] sm:$0xff]
        %v359 = vld [vmem:[#allocation4 + $0x328] sm:$0xff]
        %v360 = vld [vmem:[#allocation4 + $0x330] sm:$0xff]
        %v361 = vld [vmem:[#allocation4 + $0x338] sm:$0xff]
        %v362 = vld [vmem:[#allocation4 + $0x340] sm:$0xff]
        %v363 = vld [vmem:[#allocation4 + $0x348] sm:$0xff]
        %v364 = vld [vmem:[#allocation4 + $0x350] sm:$0xff]
        %v365 = vld [vmem:[#allocation4 + $0x358] sm:$0xff]
        %v366 = vld [vmem:[#allocation4 + $0x360] sm:$0xff]
        %v367 = vld [vmem:[#allocation4 + $0x368] sm:$0xff]
        %v368 = vld [vmem:[#allocation4 + $0x370] sm:$0xff]
        %v369 = vld [vmem:[#allocation4 + $0x378] sm:$0xff]
        %v370 = vld [vmem:[#allocation4 + $0x380] sm:$0xff]
        %v371 = vld [vmem:[#allocation4 + $0x388] sm:$0xff]
        %v372 = vld [vmem:[#allocation4 + $0x390] sm:$0xff]
        %v373 = vld [vmem:[#allocation4 + $0x398] sm:$0xff]
        %v374 = vld [vmem:[#allocation4 + $0x3a0] sm:$0xff]
        %v375 = vld [vmem:[#allocation4 + $0x3a8] sm:$0xff]
        %v376 = vld [vmem:[#allocation4 + $0x3b0] sm:$0xff]
        %v377 = vld [vmem:[#allocation4 + $0x3b8] sm:$0xff]
        %v378 = vld [vmem:[#allocation4 + $0x3c0] sm:$0xff]
        %v379 = vld [vmem:[#allocation4 + $0x3c8] sm:$0xff]
        %v380 = vld [vmem:[#allocation4 + $0x3d0] sm:$0xff]
        %v381 = vld [vmem:[#allocation4 + $0x3d8] sm:$0xff]
        %v382 = vld [vmem:[#allocation4 + $0x3e0] sm:$0xff]
        %v383 = vld [vmem:[#allocation4 + $0x3e8] sm:$0xff]
        %v384 = vld [vmem:[#allocation4 + $0x3f0] sm:$0xff]
        %v385 = vld [vmem:[#allocation4 + $0x3f8] sm:$0xff]
        %v386 = vld [vmem:[#allocation4 + $0x400] sm:$0xff]
        %v387 = vld [vmem:[#allocation4 + $0x408] sm:$0xff]
        %v388 = vld [vmem:[#allocation4 + $0x410] sm:$0xff]
        %v389 = vld [vmem:[#allocation4 + $0x418] sm:$0xff]
        %v390 = vld [vmem:[#allocation4 + $0x420] sm:$0xff]
        %v391 = vld [vmem:[#allocation4 + $0x428] sm:$0xff]
        %v392 = vld [vmem:[#allocation4 + $0x430] sm:$0xff]
        %v393 = vld [vmem:[#allocation4 + $0x438] sm:$0xff]
        %v394 = vld [vmem:[#allocation4 + $0x440] sm:$0xff]
        %v395 = vld [vmem:[#allocation4 + $0x448] sm:$0xff]
        %v396 = vld [vmem:[#allocation4 + $0x450] sm:$0xff]
        %v397 = vld [vmem:[#allocation4 + $0x458] sm:$0xff]
        %v398 = vld [vmem:[#allocation4 + $0x460] sm:$0xff]
        %v399 = vld [vmem:[#allocation4 + $0x468] sm:$0xff]
        %v400 = vld [vmem:[#allocation4 + $0x470] sm:$0xff]
        %v401 = vld [vmem:[#allocation4 + $0x478] sm:$0xff]
        %v402 = vld [vmem:[#allocation4 + $0x480] sm:$0xff]
        %v403 = vld [vmem:[#allocation4 + $0x488] sm:$0xff]
        %v404 = vld [vmem:[#allocation4 + $0x490] sm:$0xff]
        %v405 = vld [vmem:[#allocation4 + $0x498] sm:$0xff]
        %v406 = vld [vmem:[#allocation4 + $0x4a0] sm:$0xff]
        %v407 = vld [vmem:[#allocation4 + $0x4a8] sm:$0xff]
        %v408 = vld [vmem:[#allocation4 + $0x4b0] sm:$0xff]
        %v409 = vld [vmem:[#allocation4 + $0x4b8] sm:$0xff]
        %v410 = vld [vmem:[#allocation4 + $0x4c0] sm:$0xff]
        %v411 = vld [vmem:[#allocation4 + $0x4c8] sm:$0xff]
        %v412 = vld [vmem:[#allocation4 + $0x4d0] sm:$0xff]
        %v413 = vld [vmem:[#allocation4 + $0x4d8] sm:$0xff]
        %v414 = vld [vmem:[#allocation4 + $0x4e0] sm:$0xff]
        %v415 = vld [vmem:[#allocation4 + $0x4e8] sm:$0xff]
        %v416 = vld [vmem:[#allocation4 + $0x4f0] sm:$0xff]
        %v417 = vld [vmem:[#allocation4 + $0x4f8] sm:$0xff]
        %v418 = vld [vmem:[#allocation4 + $0x500] sm:$0xff]
        %v419 = vld [vmem:[#allocation4 + $0x508] sm:$0xff]
        %v420 = vld [vmem:[#allocation4 + $0x510] sm:$0xff]
        %v421 = vld [vmem:[#allocation4 + $0x518] sm:$0xff]
        %v422 = vld [vmem:[#allocation4 + $0x520] sm:$0xff]
        %v423 = vld [vmem:[#allocation4 + $0x528] sm:$0xff]
        %v424 = vld [vmem:[#allocation4 + $0x530] sm:$0xff]
        %v425 = vld [vmem:[#allocation4 + $0x538] sm:$0xff]
        %v426 = vld [vmem:[#allocation4 + $0x540] sm:$0xff]
        %v427 = vld [vmem:[#allocation4 + $0x548] sm:$0xff]
        %v428 = vld [vmem:[#allocation4 + $0x550] sm:$0xff]
        %v429 = vld [vmem:[#allocation4 + $0x558] sm:$0xff]
        %v430 = vld [vmem:[#allocation4 + $0x560] sm:$0xff]
        %v431 = vld [vmem:[#allocation4 + $0x568] sm:$0xff]
        %v432 = vld [vmem:[#allocation4 + $0x570] sm:$0xff]
        %v433 = vld [vmem:[#allocation4 + $0x578] sm:$0xff]
        %v434 = vld [vmem:[#allocation4 + $0x580] sm:$0xff]
        %v435 = vld [vmem:[#allocation4 + $0x588] sm:$0xff]
        %v436 = vld [vmem:[#allocation4 + $0x590] sm:$0xff]
        %v437 = vld [vmem:[#allocation4 + $0x598] sm:$0xff]
        %v438 = vld [vmem:[#allocation4 + $0x5a0] sm:$0xff]
        %v439 = vld [vmem:[#allocation4 + $0x5a8] sm:$0xff]
        %v440 = vld [vmem:[#allocation4 + $0x5b0] sm:$0xff]
        %v441 = vld [vmem:[#allocation4 + $0x5b8] sm:$0xff]
        %v442 = vld [vmem:[#allocation4 + $0x5c0] sm:$0xff]
        %v443 = vld [vmem:[#allocation4 + $0x5c8] sm:$0xff]
        %v444 = vld [vmem:[#allocation4 + $0x5d0] sm:$0xff]
        %v445 = vld [vmem:[#allocation4 + $0x5d8] sm:$0xff]
        %v446 = vld [vmem:[#allocation4 + $0x5e0] sm:$0xff]
        %v447 = vld [vmem:[#allocation4 + $0x5e8] sm:$0xff]
        %v448 = vld [vmem:[#allocation4 + $0x5f0] sm:$0xff]
        %v449 = vld [vmem:[#allocation4 + $0x5f8] sm:$0xff]
        %v450 = vld [vmem:[#allocation4 + $0x600] sm:$0xff]
        %v451 = vld [vmem:[#allocation4 + $0x608] sm:$0xff]
        %v452 = vld [vmem:[#allocation4 + $0x610] sm:$0xff]
        %v453 = vld [vmem:[#allocation4 + $0x618] sm:$0xff]
        %v454 = vld [vmem:[#allocation4 + $0x620] sm:$0xff]
        %v455 = vld [vmem:[#allocation4 + $0x628] sm:$0xff]
        %v456 = vld [vmem:[#allocation4 + $0x630] sm:$0xff]
        %v457 = vld [vmem:[#allocation4 + $0x638] sm:$0xff]
        %v458 = vld [vmem:[#allocation4 + $0x640] sm:$0xff]
        %v459 = vld [vmem:[#allocation4 + $0x648] sm:$0xff]
        %v460 = vld [vmem:[#allocation4 + $0x650] sm:$0xff]
        %v461 = vld [vmem:[#allocation4 + $0x658] sm:$0xff]
        %v462 = vld [vmem:[#allocation4 + $0x660] sm:$0xff]
        %v463 = vld [vmem:[#allocation4 + $0x668] sm:$0xff]
        %v464 = vld [vmem:[#allocation4 + $0x670] sm:$0xff]
        %v465 = vld [vmem:[#allocation4 + $0x678] sm:$0xff]
        %v466 = vld [vmem:[#allocation4 + $0x680] sm:$0xff]
        %v467 = vld [vmem:[#allocation4 + $0x688] sm:$0xff]
        %v468 = vld [vmem:[#allocation4 + $0x690] sm:$0xff]
        %v469 = vld [vmem:[#allocation4 + $0x698] sm:$0xff]
        %v470 = vld [vmem:[#allocation4 + $0x6a0] sm:$0xff]
        %v471 = vld [vmem:[#allocation4 + $0x6a8] sm:$0xff]
        %v472 = vld [vmem:[#allocation4 + $0x6b0] sm:$0xff]
        %v473 = vld [vmem:[#allocation4 + $0x6b8] sm:$0xff]
        %v474 = vld [vmem:[#allocation4 + $0x6c0] sm:$0xff]
        %v475 = vld [vmem:[#allocation4 + $0x6c8] sm:$0xff]
        %v476 = vld [vmem:[#allocation4 + $0x6d0] sm:$0xff]
        %v477 = vld [vmem:[#allocation4 + $0x6d8] sm:$0xff]
        %v478 = vld [vmem:[#allocation4 + $0x6e0] sm:$0xff]
        %v479 = vld [vmem:[#allocation4 + $0x6e8] sm:$0xff]
        %v480 = vld [vmem:[#allocation4 + $0x6f0] sm:$0xff]
        %v481 = vld [vmem:[#allocation4 + $0x6f8] sm:$0xff]
        %v482 = vld [vmem:[#allocation4 + $0x700] sm:$0xff]
        %v483 = vld [vmem:[#allocation4 + $0x708] sm:$0xff]
        %v484 = vld [vmem:[#allocation4 + $0x710] sm:$0xff]
        %v485 = vld [vmem:[#allocation4 + $0x718] sm:$0xff]
        %v486 = vld [vmem:[#allocation4 + $0x720] sm:$0xff]
        %v487 = vld [vmem:[#allocation4 + $0x728] sm:$0xff]
        %v488 = vld [vmem:[#allocation4 + $0x730] sm:$0xff]
        %v489 = vld [vmem:[#allocation4 + $0x738] sm:$0xff]
        %v490 = vld [vmem:[#allocation4 + $0x740] sm:$0xff]
        %v491 = vld [vmem:[#allocation4 + $0x748] sm:$0xff]
        %v492 = vld [vmem:[#allocation4 + $0x750] sm:$0xff]
        %v493 = vld [vmem:[#allocation4 + $0x758] sm:$0xff]
        %v494 = vld [vmem:[#allocation4 + $0x760] sm:$0xff]
        %v495 = vld [vmem:[#allocation4 + $0x768] sm:$0xff]
        %v496 = vld [vmem:[#allocation4 + $0x770] sm:$0xff]
        %v497 = vld [vmem:[#allocation4 + $0x778] sm:$0xff]
        %v498 = vld [vmem:[#allocation4 + $0x780] sm:$0xff]
        %v499 = vld [vmem:[#allocation4 + $0x788] sm:$0xff]
        %v500 = vld [vmem:[#allocation4 + $0x790] sm:$0xff]
        %v501 = vld [vmem:[#allocation4 + $0x798] sm:$0xff]
        %v502 = vld [vmem:[#allocation4 + $0x7a0] sm:$0xff]
        %v503 = vld [vmem:[#allocation4 + $0x7a8] sm:$0xff]
        %v504 = vld [vmem:[#allocation4 + $0x7b0] sm:$0xff]
        %v505 = vld [vmem:[#allocation4 + $0x7b8] sm:$0xff]
        %v506 = vld [vmem:[#allocation4 + $0x7c0] sm:$0xff]
        %v507 = vld [vmem:[#allocation4 + $0x7c8] sm:$0xff]
        %v508 = vld [vmem:[#allocation4 + $0x7d0] sm:$0xff]
        %v509 = vld [vmem:[#allocation4 + $0x7d8] sm:$0xff]
        %v510 = vld [vmem:[#allocation4 + $0x7e0] sm:$0xff]
        %v511 = vld [vmem:[#allocation4 + $0x7e8] sm:$0xff]
        %v512 = vld [vmem:[#allocation4 + $0x7f0] sm:$0xff]
        %v513 = vld [vmem:[#allocation4 + $0x7f8] sm:$0xff]
        %v514 = vld [vmem:[#allocation4 + $0x800] sm:$0xff]
        %v515 = vld [vmem:[#allocation4 + $0x808] sm:$0xff]
        %v516 = vld [vmem:[#allocation4 + $0x810] sm:$0xff]
        %v517 = vld [vmem:[#allocation4 + $0x818] sm:$0xff]
        %v518 = vld [vmem:[#allocation4 + $0x820] sm:$0xff]
        %v519 = vld [vmem:[#allocation4 + $0x828] sm:$0xff]
        %v520 = vld [vmem:[#allocation4 + $0x830] sm:$0xff]
        %v521 = vld [vmem:[#allocation4 + $0x838] sm:$0xff]
        %v522 = vld [vmem:[#allocation4 + $0x840] sm:$0xff]
        %v523 = vld [vmem:[#allocation4 + $0x848] sm:$0xff]
        %v524 = vld [vmem:[#allocation4 + $0x850] sm:$0xff]
        %v525 = vld [vmem:[#allocation4 + $0x858] sm:$0xff]
        %v526 = vld [vmem:[#allocation4 + $0x860] sm:$0xff]
        %v527 = vld [vmem:[#allocation4 + $0x868] sm:$0xff]
        %v528 = vld [vmem:[#allocation4 + $0x870] sm:$0xff]
        %v529 = vld [vmem:[#allocation4 + $0x878] sm:$0xff]
        %v530 = vld [vmem:[#allocation4 + $0x880] sm:$0xff]
        %v531 = vld [vmem:[#allocation4 + $0x888] sm:$0xff]
        %v532 = vld [vmem:[#allocation4 + $0x890] sm:$0xff]
        %v533 = vld [vmem:[#allocation4 + $0x898] sm:$0xff]
        %v534 = vld [vmem:[#allocation4 + $0x8a0] sm:$0xff]
        %v535 = vld [vmem:[#allocation4 + $0x8a8] sm:$0xff]
        %v536 = vld [vmem:[#allocation4 + $0x8b0] sm:$0xff]
        %v537 = vld [vmem:[#allocation4 + $0x8b8] sm:$0xff]
        %v538 = vld [vmem:[#allocation4 + $0x8c0] sm:$0xff]
        %v539 = vld [vmem:[#allocation4 + $0x8c8] sm:$0xff]
        %v540 = vld [vmem:[#allocation4 + $0x8d0] sm:$0xff]
        %v541 = vld [vmem:[#allocation4 + $0x8d8] sm:$0xff]
        %v542 = vld [vmem:[#allocation4 + $0x8e0] sm:$0xff]
        %v543 = vld [vmem:[#allocation4 + $0x8e8] sm:$0xff]
        %v544 = vld [vmem:[#allocation4 + $0x8f0] sm:$0xff]
        %v545 = vld [vmem:[#allocation4 + $0x8f8] sm:$0xff]
        %v548 = vcombine.high %v256, %v256
        %vm550 = vcmask 261120
        %v551 = vsel %vm550, %v257, 0
        %553 = vmatprep.subr.mxu0 %v379
        %554 = vmatpush1.msra.mxu0 %v378
        %555 = vmatprep.subr.mxu0 %v371
        %556 = vmatpush1.msra.mxu0 %v370
        %557 = vmatprep.subr.mxu0 %v363
        %558 = vmatpush1.msra.mxu0 %v362
        %559 = vmatprep.subr.mxu0 %v355
        %560 = vmatpush1.msra.mxu0 %v354
        %561 = vmatprep.subr.mxu0 %v347
        %562 = vmatpush1.msra.mxu0 %v346
        %563 = vmatprep.subr.mxu0 %v339
        %564 = vmatpush1.msra.mxu0 %v338
        %565 = vmatprep.subr.mxu0 %v331
        %566 = vmatpush1.msra.mxu0 %v330
        %567 = vmatprep.subr.mxu0 %v323
        %568 = vmatpush1.msra.mxu0 %v322
        %569 = vmatprep.subr.mxu0 %v315
        %570 = vmatpush1.msra.mxu0 %v314
        %571 = vmatprep.subr.mxu0 %v307
        %572 = vmatpush1.msra.mxu0 %v306
        %573 = vmatprep.subr.mxu0 %v299
        %574 = vmatpush1.msra.mxu0 %v298
        %575 = vmatprep.subr.mxu0 %v291
        %576 = vmatpush1.msra.mxu0 %v290
        %577 = vmatprep.subr.mxu0 %v283
        %578 = vmatpush1.msra.mxu0 %v282
        %579 = vmatprep.subr.mxu0 %v275
        %580 = vmatpush1.msra.mxu0 %v274
        %581 = vmatprep.subr.mxu0 %v267
        %582 = vmatpush1.msra.mxu0 %v266
        %583 = vmatprep.subr.mxu0 %v259
        %584 = vmatpush1.msra.mxu0 %v258
        %585 = vmatprep.subr.mxu0 %v507
        %586 = vmatpush2.msra.mxu0 %v506
        %587 = vmatprep.subr.mxu0 %v499
        %588 = vmatpush2.msra.mxu0 %v498
        %589 = vmatprep.subr.mxu0 %v491
        %590 = vmatpush2.msra.mxu0 %v490
        %591 = vmatprep.subr.mxu0 %v483
        %592 = vmatpush2.msra.mxu0 %v482
        %593 = vmatprep.subr.mxu0 %v475
        %594 = vmatpush2.msra.mxu0 %v474
        %595 = vmatprep.subr.mxu0 %v467
        %596 = vmatpush2.msra.mxu0 %v466
        %597 = vmatprep.subr.mxu0 %v459
        %598 = vmatpush2.msra.mxu0 %v458
        %599 = vmatprep.subr.mxu0 %v451
        %600 = vmatpush2.msra.mxu0 %v450
        %601 = vmatprep.subr.mxu0 %v443
        %602 = vmatpush2.msra.mxu0 %v442
        %603 = vmatprep.subr.mxu0 %v435
        %604 = vmatpush2.msra.mxu0 %v434
        %605 = vmatprep.subr.mxu0 %v427
        %606 = vmatpush2.msra.mxu0 %v426
        %607 = vmatprep.subr.mxu0 %v419
        %608 = vmatpush2.msra.mxu0 %v418
        %609 = vmatprep.subr.mxu0 %v411
        %610 = vmatpush2.msra.mxu0 %v410
        %611 = vmatprep.subr.mxu0 %v403
        %612 = vmatpush2.msra.mxu0 %v402
        %613 = vmatprep.subr.mxu0 %v395
        %614 = vmatpush2.msra.mxu0 %v394
        %615 = vmatprep.subr.mxu0 %v387
        %616 = vmatpush2.msra.mxu0 %v386
        %617 = vmatprep.mubr.f32.mxu0 %v548
        %618 = vmatmul.mubr.f32.gmra.mxu0 %v256
        %v619 = vpop.f32.mrf.mxu0
        %v620 = vadd.f32 0.0, %v619
        %v621 = vpop.f32.mrf.mxu0
        %v622 = vadd.f32 0.0, %v621
        %623 = vdwg.mxu0
        %624 = vmatprep.subr.mxu0 0.0
        %625 = vmatpush1.msra.mxu0 0.0
        %626 = vmatprep.subr.mxu0 0.0
        %627 = vmatpush1.msra.mxu0 0.0
        %628 = vmatprep.subr.mxu0 0.0
        %629 = vmatpush1.msra.mxu0 0.0
        %630 = vmatprep.subr.mxu0 0.0
        %631 = vmatpush1.msra.mxu0 0.0
        %632 = vmatprep.subr.mxu0 0.0
        %633 = vmatpush1.msra.mxu0 0.0
        %634 = vmatprep.subr.mxu0 0.0
        %635 = vmatpush1.msra.mxu0 0.0
        %636 = vmatprep.subr.mxu0 0.0
        %637 = vmatpush1.msra.mxu0 0.0
        %638 = vmatprep.subr.mxu0 0.0
        %639 = vmatpush1.msra.mxu0 0.0
        %640 = vmatprep.subr.mxu0 0.0
        %641 = vmatpush1.msra.mxu0 0.0
        %642 = vmatprep.subr.mxu0 0.0
        %643 = vmatpush1.msra.mxu0 0.0
        %644 = vmatprep.subr.mxu0 0.0
        %645 = vmatpush1.msra.mxu0 0.0
        %646 = vmatprep.subr.mxu0 0.0
        %647 = vmatpush1.msra.mxu0 0.0
        %648 = vmatprep.subr.mxu0 %v539
        %649 = vmatpush1.msra.mxu0 %v538
        %650 = vmatprep.subr.mxu0 %v531
        %651 = vmatpush1.msra.mxu0 %v530
        %652 = vmatprep.subr.mxu0 %v523
        %653 = vmatpush1.msra.mxu0 %v522
        %654 = vmatprep.subr.mxu0 %v515
        %655 = vmatpush1.msra.mxu0 %v514
        %656 = vmatprep.subr.mxu0 0.0
        %657 = vmatpush2.msra.mxu0 0.0
        %658 = vmatprep.subr.mxu0 0.0
        %659 = vmatpush2.msra.mxu0 0.0
        %660 = vmatprep.subr.mxu0 0.0
        %661 = vmatpush2.msra.mxu0 0.0
        %662 = vmatprep.subr.mxu0 0.0
        %663 = vmatpush2.msra.mxu0 0.0
        %664 = vmatprep.subr.mxu0 0.0
        %665 = vmatpush2.msra.mxu0 0.0
        %666 = vmatprep.subr.mxu0 0.0
        %667 = vmatpush2.msra.mxu0 0.0
        %668 = vmatprep.subr.mxu0 0.0
        %669 = vmatpush2.msra.mxu0 0.0
        %670 = vmatprep.subr.mxu0 0.0
        %671 = vmatpush2.msra.mxu0 0.0
        %672 = vmatprep.subr.mxu0 0.0
        %673 = vmatpush2.msra.mxu0 0.0
        %674 = vmatprep.subr.mxu0 0.0
        %675 = vmatpush2.msra.mxu0 0.0
        %676 = vmatprep.subr.mxu0 0.0
        %677 = vmatpush2.msra.mxu0 0.0
        %678 = vmatprep.subr.mxu0 0.0
        %679 = vmatpush2.msra.mxu0 0.0
        %680 = vmatprep.subr.mxu0 0.0
        %681 = vmatpush2.msra.mxu0 0.0
        %682 = vmatprep.subr.mxu0 0.0
        %683 = vmatpush2.msra.mxu0 0.0
        %684 = vmatprep.subr.mxu0 0.0
        %685 = vmatpush2.msra.mxu0 0.0
        %686 = vmatprep.subr.mxu0 0.0
        %687 = vmatpush2.msra.mxu0 0.0
        %688 = vmatprep.mubr.f32.mxu0 0.0
        %689 = vmatmul.mubr.f32.gmra.mxu0 %v551
        %v690 = vpop.f32.mrf.mxu0
        %v691 = vadd.f32 %v620, %v690
        %v692 = vpop.f32.mrf.mxu0
        %v693 = vadd.f32 %v622, %v692
        %694 = vdwg.mxu0
        %695 = vmatprep.subr.mxu0 %v381
        %696 = vmatpush1.msra.mxu0 %v380
        %697 = vmatprep.subr.mxu0 %v373
        %698 = vmatpush1.msra.mxu0 %v372
        %699 = vmatprep.subr.mxu0 %v365
        %700 = vmatpush1.msra.mxu0 %v364
        %701 = vmatprep.subr.mxu0 %v357
        %702 = vmatpush1.msra.mxu0 %v356
        %703 = vmatprep.subr.mxu0 %v349
        %704 = vmatpush1.msra.mxu0 %v348
        %705 = vmatprep.subr.mxu0 %v341
        %706 = vmatpush1.msra.mxu0 %v340
        %707 = vmatprep.subr.mxu0 %v333
        %708 = vmatpush1.msra.mxu0 %v332
        %709 = vmatprep.subr.mxu0 %v325
        %710 = vmatpush1.msra.mxu0 %v324
        %711 = vmatprep.subr.mxu0 %v317
        %712 = vmatpush1.msra.mxu0 %v316
        %713 = vmatprep.subr.mxu0 %v309
        %714 = vmatpush1.msra.mxu0 %v308
        %715 = vmatprep.subr.mxu0 %v301
        %716 = vmatpush1.msra.mxu0 %v300
        %717 = vmatprep.subr.mxu0 %v293
        %718 = vmatpush1.msra.mxu0 %v292
        %719 = vmatprep.subr.mxu0 %v285
        %720 = vmatpush1.msra.mxu0 %v284
        %721 = vmatprep.subr.mxu0 %v277
        %722 = vmatpush1.msra.mxu0 %v276
        %723 = vmatprep.subr.mxu0 %v269
        %724 = vmatpush1.msra.mxu0 %v268
        %725 = vmatprep.subr.mxu0 %v261
        %726 = vmatpush1.msra.mxu0 %v260
        %727 = vmatprep.subr.mxu0 %v509
        %728 = vmatpush2.msra.mxu0 %v508
        %729 = vmatprep.subr.mxu0 %v501
        %730 = vmatpush2.msra.mxu0 %v500
        %731 = vmatprep.subr.mxu0 %v493
        %732 = vmatpush2.msra.mxu0 %v492
        %733 = vmatprep.subr.mxu0 %v485
        %734 = vmatpush2.msra.mxu0 %v484
        %735 = vmatprep.subr.mxu0 %v477
        %736 = vmatpush2.msra.mxu0 %v476
        %737 = vmatprep.subr.mxu0 %v469
        %738 = vmatpush2.msra.mxu0 %v468
        %739 = vmatprep.subr.mxu0 %v461
        %740 = vmatpush2.msra.mxu0 %v460
        %741 = vmatprep.subr.mxu0 %v453
        %742 = vmatpush2.msra.mxu0 %v452
        %743 = vmatprep.subr.mxu0 %v445
        %744 = vmatpush2.msra.mxu0 %v444
        %745 = vmatprep.subr.mxu0 %v437
        %746 = vmatpush2.msra.mxu0 %v436
        %747 = vmatprep.subr.mxu0 %v429
        %748 = vmatpush2.msra.mxu0 %v428
        %749 = vmatprep.subr.mxu0 %v421
        %750 = vmatpush2.msra.mxu0 %v420
        %751 = vmatprep.subr.mxu0 %v413
        %752 = vmatpush2.msra.mxu0 %v412
        %753 = vmatprep.subr.mxu0 %v405
        %754 = vmatpush2.msra.mxu0 %v404
        %755 = vmatprep.subr.mxu0 %v397
        %756 = vmatpush2.msra.mxu0 %v396
        %757 = vmatprep.subr.mxu0 %v389
        %758 = vmatpush2.msra.mxu0 %v388
        %759 = vmatprep.mubr.f32.mxu0 %v548
        %760 = vmatmul.mubr.f32.gmra.mxu0 %v256
        %v761 = vpop.f32.mrf.mxu0
        %v762 = vadd.f32 0.0, %v761
        %v763 = vpop.f32.mrf.mxu0
        %v764 = vadd.f32 0.0, %v763
        %765 = vdwg.mxu0
        %766 = vmatprep.subr.mxu0 0.0
        %767 = vmatpush1.msra.mxu0 0.0
        %768 = vmatprep.subr.mxu0 0.0
        %769 = vmatpush1.msra.mxu0 0.0
        %770 = vmatprep.subr.mxu0 0.0
        %771 = vmatpush1.msra.mxu0 0.0
        %772 = vmatprep.subr.mxu0 0.0
        %773 = vmatpush1.msra.mxu0 0.0
        %774 = vmatprep.subr.mxu0 0.0
        %775 = vmatpush1.msra.mxu0 0.0
        %776 = vmatprep.subr.mxu0 0.0
        %777 = vmatpush1.msra.mxu0 0.0
        %778 = vmatprep.subr.mxu0 0.0
        %779 = vmatpush1.msra.mxu0 0.0
        %780 = vmatprep.subr.mxu0 0.0
        %781 = vmatpush1.msra.mxu0 0.0
        %782 = vmatprep.subr.mxu0 0.0
        %783 = vmatpush1.msra.mxu0 0.0
        %784 = vmatprep.subr.mxu0 0.0
        %785 = vmatpush1.msra.mxu0 0.0
        %786 = vmatprep.subr.mxu0 0.0
        %787 = vmatpush1.msra.mxu0 0.0
        %788 = vmatprep.subr.mxu0 0.0
        %789 = vmatpush1.msra.mxu0 0.0
        %790 = vmatprep.subr.mxu0 %v541
        %791 = vmatpush1.msra.mxu0 %v540
        %792 = vmatprep.subr.mxu0 %v533
        %793 = vmatpush1.msra.mxu0 %v532
        %794 = vmatprep.subr.mxu0 %v525
        %795 = vmatpush1.msra.mxu0 %v524
        %796 = vmatprep.subr.mxu0 %v517
        %797 = vmatpush1.msra.mxu0 %v516
        %798 = vmatprep.subr.mxu0 0.0
        %799 = vmatpush2.msra.mxu0 0.0
        %800 = vmatprep.subr.mxu0 0.0
        %801 = vmatpush2.msra.mxu0 0.0
        %802 = vmatprep.subr.mxu0 0.0
        %803 = vmatpush2.msra.mxu0 0.0
        %804 = vmatprep.subr.mxu0 0.0
        %805 = vmatpush2.msra.mxu0 0.0
        %806 = vmatprep.subr.mxu0 0.0
        %807 = vmatpush2.msra.mxu0 0.0
        %808 = vmatprep.subr.mxu0 0.0
        %809 = vmatpush2.msra.mxu0 0.0
        %810 = vmatprep.subr.mxu0 0.0
        %811 = vmatpush2.msra.mxu0 0.0
        %812 = vmatprep.subr.mxu0 0.0
        %813 = vmatpush2.msra.mxu0 0.0
        %814 = vmatprep.subr.mxu0 0.0
        %815 = vmatpush2.msra.mxu0 0.0
        %816 = vmatprep.subr.mxu0 0.0
        %817 = vmatpush2.msra.mxu0 0.0
        %818 = vmatprep.subr.mxu0 0.0
        %819 = vmatpush2.msra.mxu0 0.0
        %820 = vmatprep.subr.mxu0 0.0
        %821 = vmatpush2.msra.mxu0 0.0
        %822 = vmatprep.subr.mxu0 0.0
        %823 = vmatpush2.msra.mxu0 0.0
        %824 = vmatprep.subr.mxu0 0.0
        %825 = vmatpush2.msra.mxu0 0.0
        %826 = vmatprep.subr.mxu0 0.0
        %827 = vmatpush2.msra.mxu0 0.0
        %828 = vmatprep.subr.mxu0 0.0
        %829 = vmatpush2.msra.mxu0 0.0
        %830 = vmatprep.mubr.f32.mxu0 0.0
        %831 = vmatmul.mubr.f32.gmra.mxu0 %v551
        %v832 = vpop.f32.mrf.mxu0
        %v833 = vadd.f32 %v762, %v832
        %v834 = vpop.f32.mrf.mxu0
        %v835 = vadd.f32 %v764, %v834
        %836 = vdwg.mxu0
        %837 = vmatprep.subr.mxu0 %v383
        %838 = vmatpush1.msra.mxu0 %v382
        %839 = vmatprep.subr.mxu0 %v375
        %840 = vmatpush1.msra.mxu0 %v374
        %841 = vmatprep.subr.mxu0 %v367
        %842 = vmatpush1.msra.mxu0 %v366
        %843 = vmatprep.subr.mxu0 %v359
        %844 = vmatpush1.msra.mxu0 %v358
        %845 = vmatprep.subr.mxu0 %v351
        %846 = vmatpush1.msra.mxu0 %v350
        %847 = vmatprep.subr.mxu0 %v343
        %848 = vmatpush1.msra.mxu0 %v342
        %849 = vmatprep.subr.mxu0 %v335
        %850 = vmatpush1.msra.mxu0 %v334
        %851 = vmatprep.subr.mxu0 %v327
        %852 = vmatpush1.msra.mxu0 %v326
        %853 = vmatprep.subr.mxu0 %v319
        %854 = vmatpush1.msra.mxu0 %v318
        %855 = vmatprep.subr.mxu0 %v311
        %856 = vmatpush1.msra.mxu0 %v310
        %857 = vmatprep.subr.mxu0 %v303
        %858 = vmatpush1.msra.mxu0 %v302
        %859 = vmatprep.subr.mxu0 %v295
        %860 = vmatpush1.msra.mxu0 %v294
        %861 = vmatprep.subr.mxu0 %v287
        %862 = vmatpush1.msra.mxu0 %v286
        %863 = vmatprep.subr.mxu0 %v279
        %864 = vmatpush1.msra.mxu0 %v278
        %865 = vmatprep.subr.mxu0 %v271
        %866 = vmatpush1.msra.mxu0 %v270
        %867 = vmatprep.subr.mxu0 %v263
        %868 = vmatpush1.msra.mxu0 %v262
        %869 = vmatprep.subr.mxu0 %v511
        %870 = vmatpush2.msra.mxu0 %v510
        %871 = vmatprep.subr.mxu0 %v503
        %872 = vmatpush2.msra.mxu0 %v502
        %873 = vmatprep.subr.mxu0 %v495
        %874 = vmatpush2.msra.mxu0 %v494
        %875 = vmatprep.subr.mxu0 %v487
        %876 = vmatpush2.msra.mxu0 %v486
        %877 = vmatprep.subr.mxu0 %v479
        %878 = vmatpush2.msra.mxu0 %v478
        %879 = vmatprep.subr.mxu0 %v471
        %880 = vmatpush2.msra.mxu0 %v470
        %881 = vmatprep.subr.mxu0 %v463
        %882 = vmatpush2.msra.mxu0 %v462
        %883 = vmatprep.subr.mxu0 %v455
        %884 = vmatpush2.msra.mxu0 %v454
        %885 = vmatprep.subr.mxu0 %v447
        %886 = vmatpush2.msra.mxu0 %v446
        %887 = vmatprep.subr.mxu0 %v439
        %888 = vmatpush2.msra.mxu0 %v438
        %889 = vmatprep.subr.mxu0 %v431
        %890 = vmatpush2.msra.mxu0 %v430
        %891 = vmatprep.subr.mxu0 %v423
        %892 = vmatpush2.msra.mxu0 %v422
        %893 = vmatprep.subr.mxu0 %v415
        %894 = vmatpush2.msra.mxu0 %v414
        %895 = vmatprep.subr.mxu0 %v407
        %896 = vmatpush2.msra.mxu0 %v406
        %897 = vmatprep.subr.mxu0 %v399
        %898 = vmatpush2.msra.mxu0 %v398
        %899 = vmatprep.subr.mxu0 %v391
        %900 = vmatpush2.msra.mxu0 %v390
        %901 = vmatprep.mubr.f32.mxu0 %v548
        %902 = vmatmul.mubr.f32.gmra.mxu0 %v256
        %v903 = vpop.f32.mrf.mxu0
        %v904 = vadd.f32 0.0, %v903
        %v905 = vpop.f32.mrf.mxu0
        %v906 = vadd.f32 0.0, %v905
        %907 = vdwg.mxu0
        %908 = vmatprep.subr.mxu0 0.0
        %909 = vmatpush1.msra.mxu0 0.0
        %910 = vmatprep.subr.mxu0 0.0
        %911 = vmatpush1.msra.mxu0 0.0
        %912 = vmatprep.subr.mxu0 0.0
        %913 = vmatpush1.msra.mxu0 0.0
        %914 = vmatprep.subr.mxu0 0.0
        %915 = vmatpush1.msra.mxu0 0.0
        %916 = vmatprep.subr.mxu0 0.0
        %917 = vmatpush1.msra.mxu0 0.0
        %918 = vmatprep.subr.mxu0 0.0
        %919 = vmatpush1.msra.mxu0 0.0
        %920 = vmatprep.subr.mxu0 0.0
        %921 = vmatpush1.msra.mxu0 0.0
        %922 = vmatprep.subr.mxu0 0.0
        %923 = vmatpush1.msra.mxu0 0.0
        %924 = vmatprep.subr.mxu0 0.0
        %925 = vmatpush1.msra.mxu0 0.0
        %926 = vmatprep.subr.mxu0 0.0
        %927 = vmatpush1.msra.mxu0 0.0
        %928 = vmatprep.subr.mxu0 0.0
        %929 = vmatpush1.msra.mxu0 0.0
        %930 = vmatprep.subr.mxu0 0.0
        %931 = vmatpush1.msra.mxu0 0.0
        %932 = vmatprep.subr.mxu0 %v543
        %933 = vmatpush1.msra.mxu0 %v542
        %934 = vmatprep.subr.mxu0 %v535
        %935 = vmatpush1.msra.mxu0 %v534
        %936 = vmatprep.subr.mxu0 %v527
        %937 = vmatpush1.msra.mxu0 %v526
        %938 = vmatprep.subr.mxu0 %v519
        %939 = vmatpush1.msra.mxu0 %v518
        %940 = vmatprep.subr.mxu0 0.0
        %941 = vmatpush2.msra.mxu0 0.0
        %942 = vmatprep.subr.mxu0 0.0
        %943 = vmatpush2.msra.mxu0 0.0
        %944 = vmatprep.subr.mxu0 0.0
        %945 = vmatpush2.msra.mxu0 0.0
        %946 = vmatprep.subr.mxu0 0.0
        %947 = vmatpush2.msra.mxu0 0.0
        %948 = vmatprep.subr.mxu0 0.0
        %949 = vmatpush2.msra.mxu0 0.0
        %950 = vmatprep.subr.mxu0 0.0
        %951 = vmatpush2.msra.mxu0 0.0
        %952 = vmatprep.subr.mxu0 0.0
        %953 = vmatpush2.msra.mxu0 0.0
        %954 = vmatprep.subr.mxu0 0.0
        %955 = vmatpush2.msra.mxu0 0.0
        %956 = vmatprep.subr.mxu0 0.0
        %957 = vmatpush2.msra.mxu0 0.0
        %958 = vmatprep.subr.mxu0 0.0
        %959 = vmatpush2.msra.mxu0 0.0
        %960 = vmatprep.subr.mxu0 0.0
        %961 = vmatpush2.msra.mxu0 0.0
        %962 = vmatprep.subr.mxu0 0.0
        %963 = vmatpush2.msra.mxu0 0.0
        %964 = vmatprep.subr.mxu0 0.0
        %965 = vmatpush2.msra.mxu0 0.0
        %966 = vmatprep.subr.mxu0 0.0
        %967 = vmatpush2.msra.mxu0 0.0
        %968 = vmatprep.subr.mxu0 0.0
        %969 = vmatpush2.msra.mxu0 0.0
        %970 = vmatprep.subr.mxu0 0.0
        %971 = vmatpush2.msra.mxu0 0.0
        %972 = vmatprep.mubr.f32.mxu0 0.0
        %973 = vmatmul.mubr.f32.gmra.mxu0 %v551
        %v974 = vpop.f32.mrf.mxu0
        %v975 = vadd.f32 %v904, %v974
        %v976 = vpop.f32.mrf.mxu0
        %v977 = vadd.f32 %v906, %v976
        %978 = vdwg.mxu0
        %979 = vmatprep.subr.mxu0 %v385
        %980 = vmatpush1.msra.mxu0 %v384
        %981 = vmatprep.subr.mxu0 %v377
        %982 = vmatpush1.msra.mxu0 %v376
        %983 = vmatprep.subr.mxu0 %v369
        %984 = vmatpush1.msra.mxu0 %v368
        %985 = vmatprep.subr.mxu0 %v361
        %986 = vmatpush1.msra.mxu0 %v360
        %987 = vmatprep.subr.mxu0 %v353
        %988 = vmatpush1.msra.mxu0 %v352
        %989 = vmatprep.subr.mxu0 %v345
        %990 = vmatpush1.msra.mxu0 %v344
        %991 = vmatprep.subr.mxu0 %v337
        %992 = vmatpush1.msra.mxu0 %v336
        %993 = vmatprep.subr.mxu0 %v329
        %994 = vmatpush1.msra.mxu0 %v328
        %995 = vmatprep.subr.mxu0 %v321
        %996 = vmatpush1.msra.mxu0 %v320
        %997 = vmatprep.subr.mxu0 %v313
        %998 = vmatpush1.msra.mxu0 %v312
        %999 = vmatprep.subr.mxu0 %v305
        %1000 = vmatpush1.msra.mxu0 %v304
        %1001 = vmatprep.subr.mxu0 %v297
        %1002 = vmatpush1.msra.mxu0 %v296
        %1003 = vmatprep.subr.mxu0 %v289
        %1004 = vmatpush1.msra.mxu0 %v288
        %1005 = vmatprep.subr.mxu0 %v281
        %1006 = vmatpush1.msra.mxu0 %v280
        %1007 = vmatprep.subr.mxu0 %v273
        %1008 = vmatpush1.msra.mxu0 %v272
        %1009 = vmatprep.subr.mxu0 %v265
        %1010 = vmatpush1.msra.mxu0 %v264
        %1011 = vmatprep.subr.mxu0 %v513
        %1012 = vmatpush2.msra.mxu0 %v512
        %1013 = vmatprep.subr.mxu0 %v505
        %1014 = vmatpush2.msra.mxu0 %v504
        %1015 = vmatprep.subr.mxu0 %v497
        %1016 = vmatpush2.msra.mxu0 %v496
        %1017 = vmatprep.subr.mxu0 %v489
        %1018 = vmatpush2.msra.mxu0 %v488
        %1019 = vmatprep.subr.mxu0 %v481
        %1020 = vmatpush2.msra.mxu0 %v480
        %1021 = vmatprep.subr.mxu0 %v473
        %1022 = vmatpush2.msra.mxu0 %v472
        %1023 = vmatprep.subr.mxu0 %v465
        %1024 = vmatpush2.msra.mxu0 %v464
        %1025 = vmatprep.subr.mxu0 %v457
        %1026 = vmatpush2.msra.mxu0 %v456
        %1027 = vmatprep.subr.mxu0 %v449
        %1028 = vmatpush2.msra.mxu0 %v448
        %1029 = vmatprep.subr.mxu0 %v441
        %1030 = vmatpush2.msra.mxu0 %v440
        %1031 = vmatprep.subr.mxu0 %v433
        %1032 = vmatpush2.msra.mxu0 %v432
        %1033 = vmatprep.subr.mxu0 %v425
        %1034 = vmatpush2.msra.mxu0 %v424
        %1035 = vmatprep.subr.mxu0 %v417
        %1036 = vmatpush2.msra.mxu0 %v416
        %1037 = vmatprep.subr.mxu0 %v409
        %1038 = vmatpush2.msra.mxu0 %v408
        %1039 = vmatprep.subr.mxu0 %v401
        %1040 = vmatpush2.msra.mxu0 %v400
        %1041 = vmatprep.subr.mxu0 %v393
        %1042 = vmatpush2.msra.mxu0 %v392
        %1043 = vmatprep.mubr.f32.mxu0 %v548
        %1044 = vmatmul.mubr.f32.gmra.mxu0 %v256
        %v1045 = vpop.f32.mrf.mxu0
        %v1046 = vadd.f32 0.0, %v1045
        %v1047 = vpop.f32.mrf.mxu0
        %v1048 = vadd.f32 0.0, %v1047
        %1049 = vdwg.mxu0
        %1050 = vmatprep.subr.mxu0 0.0
        %1051 = vmatpush1.msra.mxu0 0.0
        %1052 = vmatprep.subr.mxu0 0.0
        %1053 = vmatpush1.msra.mxu0 0.0
        %1054 = vmatprep.subr.mxu0 0.0
        %1055 = vmatpush1.msra.mxu0 0.0
        %1056 = vmatprep.subr.mxu0 0.0
        %1057 = vmatpush1.msra.mxu0 0.0
        %1058 = vmatprep.subr.mxu0 0.0
        %1059 = vmatpush1.msra.mxu0 0.0
        %1060 = vmatprep.subr.mxu0 0.0
        %1061 = vmatpush1.msra.mxu0 0.0
        %1062 = vmatprep.subr.mxu0 0.0
        %1063 = vmatpush1.msra.mxu0 0.0
        %1064 = vmatprep.subr.mxu0 0.0
        %1065 = vmatpush1.msra.mxu0 0.0
        %1066 = vmatprep.subr.mxu0 0.0
        %1067 = vmatpush1.msra.mxu0 0.0
        %1068 = vmatprep.subr.mxu0 0.0
        %1069 = vmatpush1.msra.mxu0 0.0
        %1070 = vmatprep.subr.mxu0 0.0
        %1071 = vmatpush1.msra.mxu0 0.0
        %1072 = vmatprep.subr.mxu0 0.0
        %1073 = vmatpush1.msra.mxu0 0.0
        %1074 = vmatprep.subr.mxu0 %v545
        %1075 = vmatpush1.msra.mxu0 %v544
        %1076 = vmatprep.subr.mxu0 %v537
        %1077 = vmatpush1.msra.mxu0 %v536
        %1078 = vmatprep.subr.mxu0 %v529
        %1079 = vmatpush1.msra.mxu0 %v528
        %1080 = vmatprep.subr.mxu0 %v521
        %1081 = vmatpush1.msra.mxu0 %v520
        %1082 = vmatprep.subr.mxu0 0.0
        %1083 = vmatpush2.msra.mxu0 0.0
        %1084 = vmatprep.subr.mxu0 0.0
        %1085 = vmatpush2.msra.mxu0 0.0
        %1086 = vmatprep.subr.mxu0 0.0
        %1087 = vmatpush2.msra.mxu0 0.0
        %1088 = vmatprep.subr.mxu0 0.0
        %1089 = vmatpush2.msra.mxu0 0.0
        %1090 = vmatprep.subr.mxu0 0.0
        %1091 = vmatpush2.msra.mxu0 0.0
        %1092 = vmatprep.subr.mxu0 0.0
        %1093 = vmatpush2.msra.mxu0 0.0
        %1094 = vmatprep.subr.mxu0 0.0
        %1095 = vmatpush2.msra.mxu0 0.0
        %1096 = vmatprep.subr.mxu0 0.0
        %1097 = vmatpush2.msra.mxu0 0.0
        %1098 = vmatprep.subr.mxu0 0.0
        %1099 = vmatpush2.msra.mxu0 0.0
        %1100 = vmatprep.subr.mxu0 0.0
        %1101 = vmatpush2.msra.mxu0 0.0
        %1102 = vmatprep.subr.mxu0 0.0
        %1103 = vmatpush2.msra.mxu0 0.0
        %1104 = vmatprep.subr.mxu0 0.0
        %1105 = vmatpush2.msra.mxu0 0.0
        %1106 = vmatprep.subr.mxu0 0.0
        %1107 = vmatpush2.msra.mxu0 0.0
        %1108 = vmatprep.subr.mxu0 0.0
        %1109 = vmatpush2.msra.mxu0 0.0
        %1110 = vmatprep.subr.mxu0 0.0
        %1111 = vmatpush2.msra.mxu0 0.0
        %1112 = vmatprep.subr.mxu0 0.0
        %1113 = vmatpush2.msra.mxu0 0.0
        %1114 = vmatprep.mubr.f32.mxu0 0.0
        %1115 = vmatmul.mubr.f32.gmra.mxu0 %v551
        %v1116 = vpop.f32.mrf.mxu0
        %v1117 = vadd.f32 %v1046, %v1116
        %v1118 = vpop.f32.mrf.mxu0
        %v1119 = vadd.f32 %v1048, %v1118
        %1120 = vdwg.mxu0
        %v1122 = vrot.slane %v693, 7
        %v1125 = vrot.slane %v833, 6
        %v1128 = vrot.slane %v835, 5
        %v1131 = vrot.slane %v975, 4
        %v1134 = vrot.slane %v977, 3
        %v1137 = vrot.slane %v1117, 2
        %v1140 = vrot.slane %v1119, 1
        %vm1142 = vcmask 1040384
        %v1143 = vsel %vm1142, %v691, %v1122
        %vm1144 = vcmask 1041408
        %v1145 = vsel %vm1144, %v1143, %v1125
        %vm1146 = vcmask 1042432
        %v1147 = vsel %vm1146, %v1145, %v1128
        %vm1148 = vcmask 1043456
        %v1149 = vsel %vm1148, %v1147, %v1131
        %vm1150 = vcmask 1044480
        %v1151 = vsel %vm1150, %v1149, %v1134
        %vm1152 = vcmask 1045504
        %v1153 = vsel %vm1152, %v1151, %v1137
        %vm1154 = vcmask 1046528
        %v1155 = vsel %vm1154, %v1153, %v1140
        %v1157 = vrot.slane %v691, 1
        %v1159 = vrot.slane %v833, 7
        %v1161 = vrot.slane %v835, 6
        %v1163 = vrot.slane %v975, 5
        %v1165 = vrot.slane %v977, 4
        %v1167 = vrot.slane %v1117, 3
        %v1169 = vrot.slane %v1119, 2
        %v1171 = vsel %vm1142, %v1157, %v693
        %v1172 = vsel %vm1144, %v1171, %v1159
        %v1173 = vsel %vm1146, %v1172, %v1161
        %v1174 = vsel %vm1148, %v1173, %v1163
        %v1175 = vsel %vm1150, %v1174, %v1165
        %v1176 = vsel %vm1152, %v1175, %v1167
        %v1177 = vsel %vm1154, %v1176, %v1169
        %v1178 = vrot.slane %v691, 2
        %v1180 = vrot.slane %v693, 1
        %v1182 = vrot.slane %v835, 7
        %v1184 = vrot.slane %v975, 6
        %v1186 = vrot.slane %v977, 5
        %v1188 = vrot.slane %v1117, 4
        %v1190 = vrot.slane %v1119, 3
        %v1192 = vsel %vm1142, %v1178, %v1180
        %v1193 = vsel %vm1144, %v1192, %v833
        %v1194 = vsel %vm1146, %v1193, %v1182
        %v1195 = vsel %vm1148, %v1194, %v1184
        %v1196 = vsel %vm1150, %v1195, %v1186
        %v1197 = vsel %vm1152, %v1196, %v1188
        %v1198 = vsel %vm1154, %v1197, %v1190
        %v1199 = vrot.slane %v691, 3
        %v1201 = vrot.slane %v693, 2
        %v1203 = vrot.slane %v833, 1
        %v1205 = vrot.slane %v975, 7
        %v1207 = vrot.slane %v977, 6
        %v1209 = vrot.slane %v1117, 5
        %v1211 = vrot.slane %v1119, 4
        %v1213 = vsel %vm1142, %v1199, %v1201
        %v1214 = vsel %vm1144, %v1213, %v1203
        %v1215 = vsel %vm1146, %v1214, %v835
        %v1216 = vsel %vm1148, %v1215, %v1205
        %v1217 = vsel %vm1150, %v1216, %v1207
        %v1218 = vsel %vm1152, %v1217, %v1209
        %v1219 = vsel %vm1154, %v1218, %v1211
        %v1220 = vmul.f32 %v1155, %v1177
        %1222 = vrot.lane.b32.xlu0 %v1220, 64
        %v1223 = vpop.permute.xlu0 %1222
        %v1225 = vadd.f32 %v1220, %v1223
        %1227 = vrot.lane.b32.xlu0 %v1177, 64
        %v1228 = vpop.permute.xlu0 %1227
        %v1230 = vmul.f32 %v1155, %v1228
        %1232 = vrot.lane.b32.xlu0 %v1230, 64
        %v1233 = vpop.permute.xlu0 %1232
        %v1235 = vsub.f32 %v1230, %v1233
        %v1236 = vmul.f32 %v1225, %v1225
        %v1237 = vmul.f32 %v1235, %v1235
        %1239 = vrot.lane.b32.xlu0 %v1237, 64
        %v1240 = vpop.permute.xlu0 %1239
        %v1242 = vadd.f32 %v1236, %v1240
        %v1243 = vrsqrt.pop %v1242
        %v1244 = vmul.f32 %v1242, %v1243
        %vm1245 = vcmp.eq.f32.partialorder %v1242, inf
        %v1246 = vsel %vm1245, %v1242, %v1244
        %vm1247 = vcmp.eq.f32.partialorder %v1242, 0.0
        %v1248 = vand.u32 %v1242, 2147483648
        %v1249 = vsel %vm1247, %v1248, %v1246
        %v1250 = vadd.f32 %v1249, 1e-08
        %v1251 = vrcp.pop %v1250
        %v1252 = vmul.f32 %v1225, %v1251
        %v1253 = vld [vmem:[#allocation6] sm:$0xff]
        %v1254 = vld [vmem:[#allocation6 + $0x8] sm:$0xff]
        %v1255 = vld [vmem:[#allocation6 + $0x10] sm:$0xff]
        %v1256 = vld [vmem:[#allocation6 + $0x18] sm:$0xff]
        %v1257 = vld [vmem:[#allocation6 + $0x20] sm:$0xff]
        %v1258 = vld [vmem:[#allocation6 + $0x28] sm:$0xff]
        %v1259 = vld [vmem:[#allocation6 + $0x30] sm:$0xff]
        %v1260 = vld [vmem:[#allocation6 + $0x38] sm:$0xff]
        %1262 = vrot.lane.b32.xlu0 %v1251, 64
        %v1263 = vpop.permute.xlu0 %1262
        %v1265 = vmul.f32 %v1235, %v1263
        %v1266 = vld [vmem:[#allocation6 + $0x40] sm:$0xff]
        %v1267 = vld [vmem:[#allocation6 + $0x48] sm:$0xff]
        %v1268 = vld [vmem:[#allocation6 + $0x50] sm:$0xff]
        %v1269 = vld [vmem:[#allocation6 + $0x58] sm:$0xff]
        %v1270 = vld [vmem:[#allocation6 + $0x60] sm:$0xff]
        %v1271 = vld [vmem:[#allocation6 + $0x68] sm:$0xff]
        %v1272 = vld [vmem:[#allocation6 + $0x70] sm:$0xff]
        %v1273 = vld [vmem:[#allocation6 + $0x78] sm:$0xff]
        %1275 = vrot.lane.b32.xlu0 %v1265, 64
        %v1276 = vpop.permute.xlu0 %1275
        %vm1277 = vcmask 523264
        %v1278 = vsel %vm1277, %v1276, 0
        %1280 = vmatprep.subr.mxu0 0.0
        %1281 = vmatpush1.msra.mxu0 0.0
        %1282 = vmatprep.subr.mxu0 0.0
        %1283 = vmatpush1.msra.mxu0 0.0
        %1284 = vmatprep.subr.mxu0 0.0
        %1285 = vmatpush1.msra.mxu0 0.0
        %1286 = vmatprep.subr.mxu0 0.0
        %1287 = vmatpush1.msra.mxu0 0.0
        %1288 = vmatprep.subr.mxu0 0.0
        %1289 = vmatpush1.msra.mxu0 0.0
        %1290 = vmatprep.subr.mxu0 0.0
        %1291 = vmatpush1.msra.mxu0 0.0
        %1292 = vmatprep.subr.mxu0 0.0
        %1293 = vmatpush1.msra.mxu0 0.0
        %1294 = vmatprep.subr.mxu0 0.0
        %1295 = vmatpush1.msra.mxu0 0.0
        %1296 = vmatprep.subr.mxu0 0.0
        %1297 = vmatpush1.msra.mxu0 %v1273
        %1298 = vmatprep.subr.mxu0 0.0
        %1299 = vmatpush1.msra.mxu0 %v1272
        %1300 = vmatprep.subr.mxu0 0.0
        %1301 = vmatpush1.msra.mxu0 %v1271
        %1302 = vmatprep.subr.mxu0 0.0
        %1303 = vmatpush1.msra.mxu0 %v1270
        %1304 = vmatprep.subr.mxu0 0.0
        %1305 = vmatpush1.msra.mxu0 %v1269
        %1306 = vmatprep.subr.mxu0 0.0
        %1307 = vmatpush1.msra.mxu0 %v1268
        %1308 = vmatprep.subr.mxu0 0.0
        %1309 = vmatpush1.msra.mxu0 %v1267
        %1310 = vmatprep.subr.mxu0 0.0
        %1311 = vmatpush1.msra.mxu0 %v1266
        %1312 = vmatprep.subr.mxu0 0.0
        %1313 = vmatpush2.msra.mxu0 0.0
        %1314 = vmatprep.subr.mxu0 0.0
        %1315 = vmatpush2.msra.mxu0 0.0
        %1316 = vmatprep.subr.mxu0 0.0
        %1317 = vmatpush2.msra.mxu0 0.0
        %1318 = vmatprep.subr.mxu0 0.0
        %1319 = vmatpush2.msra.mxu0 0.0
        %1320 = vmatprep.subr.mxu0 0.0
        %1321 = vmatpush2.msra.mxu0 0.0
        %1322 = vmatprep.subr.mxu0 0.0
        %1323 = vmatpush2.msra.mxu0 0.0
        %1324 = vmatprep.subr.mxu0 0.0
        %1325 = vmatpush2.msra.mxu0 0.0
        %1326 = vmatprep.subr.mxu0 0.0
        %1327 = vmatpush2.msra.mxu0 0.0
        %1328 = vmatprep.subr.mxu0 0.0
        %1329 = vmatpush2.msra.mxu0 0.0
        %1330 = vmatprep.subr.mxu0 0.0
        %1331 = vmatpush2.msra.mxu0 0.0
        %1332 = vmatprep.subr.mxu0 0.0
        %1333 = vmatpush2.msra.mxu0 0.0
        %1334 = vmatprep.subr.mxu0 0.0
        %1335 = vmatpush2.msra.mxu0 0.0
        %1336 = vmatprep.subr.mxu0 0.0
        %1337 = vmatpush2.msra.mxu0 0.0
        %1338 = vmatprep.subr.mxu0 0.0
        %1339 = vmatpush2.msra.mxu0 0.0
        %1340 = vmatprep.subr.mxu0 0.0
        %1341 = vmatpush2.msra.mxu0 0.0
        %1342 = vmatprep.subr.mxu0 0.0
        %1343 = vmatpush2.msra.mxu0 0.0
        %1344 = vmatprep.mubr.f32.mxu0 0.0
        %1345 = vmatmul.mubr.f32.gmra.mxu0 %v1278
        %v1346 = vpop.f32.mrf.mxu0
        %v1347 = vadd.f32 0.0, %v1346
        %v1348 = vpop.f32.mrf.mxu0
        %1349 = vdwg.mxu0
        %v1351 = vsel %vm1277, %v1252, 0
        %1353 = vmatprep.subr.mxu0 0.0
        %1354 = vmatpush1.msra.mxu0 0.0
        %1355 = vmatprep.subr.mxu0 0.0
        %1356 = vmatpush1.msra.mxu0 0.0
        %1357 = vmatprep.subr.mxu0 0.0
        %1358 = vmatpush1.msra.mxu0 0.0
        %1359 = vmatprep.subr.mxu0 0.0
        %1360 = vmatpush1.msra.mxu0 0.0
        %1361 = vmatprep.subr.mxu0 0.0
        %1362 = vmatpush1.msra.mxu0 0.0
        %1363 = vmatprep.subr.mxu0 0.0
        %1364 = vmatpush1.msra.mxu0 0.0
        %1365 = vmatprep.subr.mxu0 0.0
        %1366 = vmatpush1.msra.mxu0 0.0
        %1367 = vmatprep.subr.mxu0 0.0
        %1368 = vmatpush1.msra.mxu0 0.0
        %1369 = vmatprep.subr.mxu0 0.0
        %1370 = vmatpush1.msra.mxu0 %v1260
        %1371 = vmatprep.subr.mxu0 0.0
        %1372 = vmatpush1.msra.mxu0 %v1259
        %1373 = vmatprep.subr.mxu0 0.0
        %1374 = vmatpush1.msra.mxu0 %v1258
        %1375 = vmatprep.subr.mxu0 0.0
        %1376 = vmatpush1.msra.mxu0 %v1257
        %1377 = vmatprep.subr.mxu0 0.0
        %1378 = vmatpush1.msra.mxu0 %v1256
        %1379 = vmatprep.subr.mxu0 0.0
        %1380 = vmatpush1.msra.mxu0 %v1255
        %1381 = vmatprep.subr.mxu0 0.0
        %1382 = vmatpush1.msra.mxu0 %v1254
        %1383 = vmatprep.subr.mxu0 0.0
        %1384 = vmatpush1.msra.mxu0 %v1253
        %1385 = vmatprep.subr.mxu0 0.0
        %1386 = vmatpush2.msra.mxu0 0.0
        %1387 = vmatprep.subr.mxu0 0.0
        %1388 = vmatpush2.msra.mxu0 0.0
        %1389 = vmatprep.subr.mxu0 0.0
        %1390 = vmatpush2.msra.mxu0 0.0
        %1391 = vmatprep.subr.mxu0 0.0
        %1392 = vmatpush2.msra.mxu0 0.0
        %1393 = vmatprep.subr.mxu0 0.0
        %1394 = vmatpush2.msra.mxu0 0.0
        %1395 = vmatprep.subr.mxu0 0.0
        %1396 = vmatpush2.msra.mxu0 0.0
        %1397 = vmatprep.subr.mxu0 0.0
        %1398 = vmatpush2.msra.mxu0 0.0
        %1399 = vmatprep.subr.mxu0 0.0
        %1400 = vmatpush2.msra.mxu0 0.0
        %1401 = vmatprep.subr.mxu0 0.0
        %1402 = vmatpush2.msra.mxu0 0.0
        %1403 = vmatprep.subr.mxu0 0.0
        %1404 = vmatpush2.msra.mxu0 0.0
        %1405 = vmatprep.subr.mxu0 0.0
        %1406 = vmatpush2.msra.mxu0 0.0
        %1407 = vmatprep.subr.mxu0 0.0
        %1408 = vmatpush2.msra.mxu0 0.0
        %1409 = vmatprep.subr.mxu0 0.0
        %1410 = vmatpush2.msra.mxu0 0.0
        %1411 = vmatprep.subr.mxu0 0.0
        %1412 = vmatpush2.msra.mxu0 0.0
        %1413 = vmatprep.subr.mxu0 0.0
        %1414 = vmatpush2.msra.mxu0 0.0
        %1415 = vmatprep.subr.mxu0 0.0
        %1416 = vmatpush2.msra.mxu0 0.0
        %1417 = vmatprep.mubr.f32.mxu0 0.0
        %1418 = vmatmul.mubr.f32.gmra.mxu0 %v1351
        %v1419 = vpop.f32.mrf.mxu0
        %v1420 = vadd.f32 %v1347, %v1419
        %v1421 = vpop.f32.mrf.mxu0
        %1422 = vdwg.mxu0
        %v1423 = vmul.f32 %v1155, %v1198
        %1425 = vrot.lane.b32.xlu0 %v1423, 64
        %v1426 = vpop.permute.xlu0 %1425
        %v1428 = vadd.f32 %v1423, %v1426
        %1430 = vrot.lane.b32.xlu0 %v1198, 64
        %v1431 = vpop.permute.xlu0 %1430
        %v1433 = vmul.f32 %v1155, %v1431
        %1435 = vrot.lane.b32.xlu0 %v1433, 64
        %v1436 = vpop.permute.xlu0 %1435
        %v1438 = vsub.f32 %v1433, %v1436
        %v1439 = vmul.f32 %v1428, %v1428
        %v1440 = vmul.f32 %v1438, %v1438
        %1442 = vrot.lane.b32.xlu0 %v1440, 64
        %v1443 = vpop.permute.xlu0 %1442
        %v1445 = vadd.f32 %v1439, %v1443
        %v1446 = vrsqrt.pop %v1445
        %v1447 = vmul.f32 %v1445, %v1446
        %vm1448 = vcmp.eq.f32.partialorder %v1445, inf
        %v1449 = vsel %vm1448, %v1445, %v1447
        %vm1450 = vcmp.eq.f32.partialorder %v1445, 0.0
        %v1451 = vand.u32 %v1445, 2147483648
        %v1452 = vsel %vm1450, %v1451, %v1449
        %v1453 = vadd.f32 %v1452, 1e-08
        %v1454 = vrcp.pop %v1453
        %v1455 = vmul.f32 %v1428, %v1454
        %v1456 = vld [vmem:[#allocation6 + $0x80] sm:$0xff]
        %v1457 = vld [vmem:[#allocation6 + $0x88] sm:$0xff]
        %v1458 = vld [vmem:[#allocation6 + $0x90] sm:$0xff]
        %v1459 = vld [vmem:[#allocation6 + $0x98] sm:$0xff]
        %v1460 = vld [vmem:[#allocation6 + $0xa0] sm:$0xff]
        %v1461 = vld [vmem:[#allocation6 + $0xa8] sm:$0xff]
        %v1462 = vld [vmem:[#allocation6 + $0xb0] sm:$0xff]
        %v1463 = vld [vmem:[#allocation6 + $0xb8] sm:$0xff]
        %v1465 = vsel %vm1277, %v1455, 0
        %1467 = vmatprep.subr.mxu0 0.0
        %1468 = vmatpush1.msra.mxu0 0.0
        %1469 = vmatprep.subr.mxu0 0.0
        %1470 = vmatpush1.msra.mxu0 0.0
        %1471 = vmatprep.subr.mxu0 0.0
        %1472 = vmatpush1.msra.mxu0 0.0
        %1473 = vmatprep.subr.mxu0 0.0
        %1474 = vmatpush1.msra.mxu0 0.0
        %1475 = vmatprep.subr.mxu0 0.0
        %1476 = vmatpush1.msra.mxu0 0.0
        %1477 = vmatprep.subr.mxu0 0.0
        %1478 = vmatpush1.msra.mxu0 0.0
        %1479 = vmatprep.subr.mxu0 0.0
        %1480 = vmatpush1.msra.mxu0 0.0
        %1481 = vmatprep.subr.mxu0 0.0
        %1482 = vmatpush1.msra.mxu0 0.0
        %1483 = vmatprep.subr.mxu0 0.0
        %1484 = vmatpush1.msra.mxu0 %v1463
        %1485 = vmatprep.subr.mxu0 0.0
        %1486 = vmatpush1.msra.mxu0 %v1462
        %1487 = vmatprep.subr.mxu0 0.0
        %1488 = vmatpush1.msra.mxu0 %v1461
        %1489 = vmatprep.subr.mxu0 0.0
        %1490 = vmatpush1.msra.mxu0 %v1460
        %1491 = vmatprep.subr.mxu0 0.0
        %1492 = vmatpush1.msra.mxu0 %v1459
        %1493 = vmatprep.subr.mxu0 0.0
        %1494 = vmatpush1.msra.mxu0 %v1458
        %1495 = vmatprep.subr.mxu0 0.0
        %1496 = vmatpush1.msra.mxu0 %v1457
        %1497 = vmatprep.subr.mxu0 0.0
        %1498 = vmatpush1.msra.mxu0 %v1456
        %1499 = vmatprep.subr.mxu0 0.0
        %1500 = vmatpush2.msra.mxu0 0.0
        %1501 = vmatprep.subr.mxu0 0.0
        %1502 = vmatpush2.msra.mxu0 0.0
        %1503 = vmatprep.subr.mxu0 0.0
        %1504 = vmatpush2.msra.mxu0 0.0
        %1505 = vmatprep.subr.mxu0 0.0
        %1506 = vmatpush2.msra.mxu0 0.0
        %1507 = vmatprep.subr.mxu0 0.0
        %1508 = vmatpush2.msra.mxu0 0.0
        %1509 = vmatprep.subr.mxu0 0.0
        %1510 = vmatpush2.msra.mxu0 0.0
        %1511 = vmatprep.subr.mxu0 0.0
        %1512 = vmatpush2.msra.mxu0 0.0
        %1513 = vmatprep.subr.mxu0 0.0
        %1514 = vmatpush2.msra.mxu0 0.0
        %1515 = vmatprep.subr.mxu0 0.0
        %1516 = vmatpush2.msra.mxu0 0.0
        %1517 = vmatprep.subr.mxu0 0.0
        %1518 = vmatpush2.msra.mxu0 0.0
        %1519 = vmatprep.subr.mxu0 0.0
        %1520 = vmatpush2.msra.mxu0 0.0
        %1521 = vmatprep.subr.mxu0 0.0
        %1522 = vmatpush2.msra.mxu0 0.0
        %1523 = vmatprep.subr.mxu0 0.0
        %1524 = vmatpush2.msra.mxu0 0.0
        %1525 = vmatprep.subr.mxu0 0.0
        %1526 = vmatpush2.msra.mxu0 0.0
        %1527 = vmatprep.subr.mxu0 0.0
        %1528 = vmatpush2.msra.mxu0 0.0
        %1529 = vmatprep.subr.mxu0 0.0
        %1530 = vmatpush2.msra.mxu0 0.0
        %1531 = vmatprep.mubr.f32.mxu0 0.0
        %1532 = vmatmul.mubr.f32.gmra.mxu0 %v1465
        %v1533 = vpop.f32.mrf.mxu0
        %v1534 = vadd.f32 0.0, %v1533
        %v1535 = vpop.f32.mrf.mxu0
        %1536 = vdwg.mxu0
        %v1537 = vadd.f32 %v1420, %v1534
        %1539 = vrot.lane.b32.xlu0 %v1454, 64
        %v1540 = vpop.permute.xlu0 %1539
        %v1542 = vmul.f32 %v1438, %v1540
        %v1543 = vld [vmem:[#allocation6 + $0xc0] sm:$0xff]
        %v1544 = vld [vmem:[#allocation6 + $0xc8] sm:$0xff]
        %v1545 = vld [vmem:[#allocation6 + $0xd0] sm:$0xff]
        %v1546 = vld [vmem:[#allocation6 + $0xd8] sm:$0xff]
        %v1547 = vld [vmem:[#allocation6 + $0xe0] sm:$0xff]
        %v1548 = vld [vmem:[#allocation6 + $0xe8] sm:$0xff]
        %v1549 = vld [vmem:[#allocation6 + $0xf0] sm:$0xff]
        %v1550 = vld [vmem:[#allocation6 + $0xf8] sm:$0xff]
        %1552 = vrot.lane.b32.xlu0 %v1542, 64
        %v1553 = vpop.permute.xlu0 %1552
        %v1554 = vsel %vm1277, %v1553, 0
        %1556 = vmatprep.subr.mxu0 0.0
        %1557 = vmatpush1.msra.mxu0 0.0
        %1558 = vmatprep.subr.mxu0 0.0
        %1559 = vmatpush1.msra.mxu0 0.0
        %1560 = vmatprep.subr.mxu0 0.0
        %1561 = vmatpush1.msra.mxu0 0.0
        %1562 = vmatprep.subr.mxu0 0.0
        %1563 = vmatpush1.msra.mxu0 0.0
        %1564 = vmatprep.subr.mxu0 0.0
        %1565 = vmatpush1.msra.mxu0 0.0
        %1566 = vmatprep.subr.mxu0 0.0
        %1567 = vmatpush1.msra.mxu0 0.0
        %1568 = vmatprep.subr.mxu0 0.0
        %1569 = vmatpush1.msra.mxu0 0.0
        %1570 = vmatprep.subr.mxu0 0.0
        %1571 = vmatpush1.msra.mxu0 0.0
        %1572 = vmatprep.subr.mxu0 0.0
        %1573 = vmatpush1.msra.mxu0 %v1550
        %1574 = vmatprep.subr.mxu0 0.0
        %1575 = vmatpush1.msra.mxu0 %v1549
        %1576 = vmatprep.subr.mxu0 0.0
        %1577 = vmatpush1.msra.mxu0 %v1548
        %1578 = vmatprep.subr.mxu0 0.0
        %1579 = vmatpush1.msra.mxu0 %v1547
        %1580 = vmatprep.subr.mxu0 0.0
        %1581 = vmatpush1.msra.mxu0 %v1546
        %1582 = vmatprep.subr.mxu0 0.0
        %1583 = vmatpush1.msra.mxu0 %v1545
        %1584 = vmatprep.subr.mxu0 0.0
        %1585 = vmatpush1.msra.mxu0 %v1544
        %1586 = vmatprep.subr.mxu0 0.0
        %1587 = vmatpush1.msra.mxu0 %v1543
        %1588 = vmatprep.subr.mxu0 0.0
        %1589 = vmatpush2.msra.mxu0 0.0
        %1590 = vmatprep.subr.mxu0 0.0
        %1591 = vmatpush2.msra.mxu0 0.0
        %1592 = vmatprep.subr.mxu0 0.0
        %1593 = vmatpush2.msra.mxu0 0.0
        %1594 = vmatprep.subr.mxu0 0.0
        %1595 = vmatpush2.msra.mxu0 0.0
        %1596 = vmatprep.subr.mxu0 0.0
        %1597 = vmatpush2.msra.mxu0 0.0
        %1598 = vmatprep.subr.mxu0 0.0
        %1599 = vmatpush2.msra.mxu0 0.0
        %1600 = vmatprep.subr.mxu0 0.0
        %1601 = vmatpush2.msra.mxu0 0.0
        %1602 = vmatprep.subr.mxu0 0.0
        %1603 = vmatpush2.msra.mxu0 0.0
        %1604 = vmatprep.subr.mxu0 0.0
        %1605 = vmatpush2.msra.mxu0 0.0
        %1606 = vmatprep.subr.mxu0 0.0
        %1607 = vmatpush2.msra.mxu0 0.0
        %1608 = vmatprep.subr.mxu0 0.0
        %1609 = vmatpush2.msra.mxu0 0.0
        %1610 = vmatprep.subr.mxu0 0.0
        %1611 = vmatpush2.msra.mxu0 0.0
        %1612 = vmatprep.subr.mxu0 0.0
        %1613 = vmatpush2.msra.mxu0 0.0
        %1614 = vmatprep.subr.mxu0 0.0
        %1615 = vmatpush2.msra.mxu0 0.0
        %1616 = vmatprep.subr.mxu0 0.0
        %1617 = vmatpush2.msra.mxu0 0.0
        %1618 = vmatprep.subr.mxu0 0.0
        %1619 = vmatpush2.msra.mxu0 0.0
        %1620 = vmatprep.mubr.f32.mxu0 0.0
        %1621 = vmatmul.mubr.f32.gmra.mxu0 %v1554
        %v1622 = vpop.f32.mrf.mxu0
        %v1623 = vadd.f32 0.0, %v1622
        %v1624 = vpop.f32.mrf.mxu0
        %1625 = vdwg.mxu0
        %v1626 = vadd.f32 %v1537, %v1623
        %v1627 = vmul.f32 %v1155, %v1219
        %1629 = vrot.lane.b32.xlu0 %v1627, 64
        %v1630 = vpop.permute.xlu0 %1629
        %v1632 = vadd.f32 %v1627, %v1630
        %1634 = vrot.lane.b32.xlu0 %v1219, 64
        %v1635 = vpop.permute.xlu0 %1634
        %v1637 = vmul.f32 %v1155, %v1635
        %1639 = vrot.lane.b32.xlu0 %v1637, 64
        %v1640 = vpop.permute.xlu0 %1639
        %v1642 = vsub.f32 %v1637, %v1640
        %v1643 = vmul.f32 %v1632, %v1632
        %v1644 = vmul.f32 %v1642, %v1642
        %1646 = vrot.lane.b32.xlu0 %v1644, 64
        %v1647 = vpop.permute.xlu0 %1646
        %v1649 = vadd.f32 %v1643, %v1647
        %v1650 = vrsqrt.pop %v1649
        %v1651 = vmul.f32 %v1649, %v1650
        %vm1652 = vcmp.eq.f32.partialorder %v1649, inf
        %v1653 = vsel %vm1652, %v1649, %v1651
        %vm1654 = vcmp.eq.f32.partialorder %v1649, 0.0
        %v1655 = vand.u32 %v1649, 2147483648
        %v1656 = vsel %vm1654, %v1655, %v1653
        %v1657 = vadd.f32 %v1656, 1e-08
        %v1658 = vrcp.pop %v1657
        %v1659 = vmul.f32 %v1632, %v1658
        %v1660 = vld [vmem:[#allocation6 + $0x100] sm:$0xff]
        %v1661 = vld [vmem:[#allocation6 + $0x108] sm:$0xff]
        %v1662 = vld [vmem:[#allocation6 + $0x110] sm:$0xff]
        %v1663 = vld [vmem:[#allocation6 + $0x118] sm:$0xff]
        %v1664 = vld [vmem:[#allocation6 + $0x120] sm:$0xff]
        %v1665 = vld [vmem:[#allocation6 + $0x128] sm:$0xff]
        %v1666 = vld [vmem:[#allocation6 + $0x130] sm:$0xff]
        %v1667 = vld [vmem:[#allocation6 + $0x138] sm:$0xff]
        %v1669 = vsel %vm1277, %v1659, 0
        %1671 = vmatprep.subr.mxu0 0.0
        %1672 = vmatpush1.msra.mxu0 0.0
        %1673 = vmatprep.subr.mxu0 0.0
        %1674 = vmatpush1.msra.mxu0 0.0
        %1675 = vmatprep.subr.mxu0 0.0
        %1676 = vmatpush1.msra.mxu0 0.0
        %1677 = vmatprep.subr.mxu0 0.0
        %1678 = vmatpush1.msra.mxu0 0.0
        %1679 = vmatprep.subr.mxu0 0.0
        %1680 = vmatpush1.msra.mxu0 0.0
        %1681 = vmatprep.subr.mxu0 0.0
        %1682 = vmatpush1.msra.mxu0 0.0
        %1683 = vmatprep.subr.mxu0 0.0
        %1684 = vmatpush1.msra.mxu0 0.0
        %1685 = vmatprep.subr.mxu0 0.0
        %1686 = vmatpush1.msra.mxu0 0.0
        %1687 = vmatprep.subr.mxu0 0.0
        %1688 = vmatpush1.msra.mxu0 %v1667
        %1689 = vmatprep.subr.mxu0 0.0
        %1690 = vmatpush1.msra.mxu0 %v1666
        %1691 = vmatprep.subr.mxu0 0.0
        %1692 = vmatpush1.msra.mxu0 %v1665
        %1693 = vmatprep.subr.mxu0 0.0
        %1694 = vmatpush1.msra.mxu0 %v1664
        %1695 = vmatprep.subr.mxu0 0.0
        %1696 = vmatpush1.msra.mxu0 %v1663
        %1697 = vmatprep.subr.mxu0 0.0
        %1698 = vmatpush1.msra.mxu0 %v1662
        %1699 = vmatprep.subr.mxu0 0.0
        %1700 = vmatpush1.msra.mxu0 %v1661
        %1701 = vmatprep.subr.mxu0 0.0
        %1702 = vmatpush1.msra.mxu0 %v1660
        %1703 = vmatprep.subr.mxu0 0.0
        %1704 = vmatpush2.msra.mxu0 0.0
        %1705 = vmatprep.subr.mxu0 0.0
        %1706 = vmatpush2.msra.mxu0 0.0
        %1707 = vmatprep.subr.mxu0 0.0
        %1708 = vmatpush2.msra.mxu0 0.0
        %1709 = vmatprep.subr.mxu0 0.0
        %1710 = vmatpush2.msra.mxu0 0.0
        %1711 = vmatprep.subr.mxu0 0.0
        %1712 = vmatpush2.msra.mxu0 0.0
        %1713 = vmatprep.subr.mxu0 0.0
        %1714 = vmatpush2.msra.mxu0 0.0
        %1715 = vmatprep.subr.mxu0 0.0
        %1716 = vmatpush2.msra.mxu0 0.0
        %1717 = vmatprep.subr.mxu0 0.0
        %1718 = vmatpush2.msra.mxu0 0.0
        %1719 = vmatprep.subr.mxu0 0.0
        %1720 = vmatpush2.msra.mxu0 0.0
        %1721 = vmatprep.subr.mxu0 0.0
        %1722 = vmatpush2.msra.mxu0 0.0
        %1723 = vmatprep.subr.mxu0 0.0
        %1724 = vmatpush2.msra.mxu0 0.0
        %1725 = vmatprep.subr.mxu0 0.0
        %1726 = vmatpush2.msra.mxu0 0.0
        %1727 = vmatprep.subr.mxu0 0.0
        %1728 = vmatpush2.msra.mxu0 0.0
        %1729 = vmatprep.subr.mxu0 0.0
        %1730 = vmatpush2.msra.mxu0 0.0
        %1731 = vmatprep.subr.mxu0 0.0
        %1732 = vmatpush2.msra.mxu0 0.0
        %1733 = vmatprep.subr.mxu0 0.0
        %1734 = vmatpush2.msra.mxu0 0.0
        %1735 = vmatprep.mubr.f32.mxu0 0.0
        %1736 = vmatmul.mubr.f32.gmra.mxu0 %v1669
        %v1737 = vpop.f32.mrf.mxu0
        %v1738 = vadd.f32 0.0, %v1737
        %v1739 = vpop.f32.mrf.mxu0
        %1740 = vdwg.mxu0
        %v1741 = vadd.f32 %v1626, %v1738
        %1743 = vrot.lane.b32.xlu0 %v1658, 64
        %v1744 = vpop.permute.xlu0 %1743
        %v1746 = vmul.f32 %v1642, %v1744
        %v1747 = vld [vmem:[#allocation6 + $0x140] sm:$0xff]
        %v1748 = vld [vmem:[#allocation6 + $0x148] sm:$0xff]
        %v1749 = vld [vmem:[#allocation6 + $0x150] sm:$0xff]
        %v1750 = vld [vmem:[#allocation6 + $0x158] sm:$0xff]
        %v1751 = vld [vmem:[#allocation6 + $0x160] sm:$0xff]
        %v1752 = vld [vmem:[#allocation6 + $0x168] sm:$0xff]
        %v1753 = vld [vmem:[#allocation6 + $0x170] sm:$0xff]
        %v1754 = vld [vmem:[#allocation6 + $0x178] sm:$0xff]
        %1756 = vrot.lane.b32.xlu0 %v1746, 64
        %v1757 = vpop.permute.xlu0 %1756
        %v1758 = vsel %vm1277, %v1757, 0
        %1760 = vmatprep.subr.mxu0 0.0
        %1761 = vmatpush1.msra.mxu0 0.0
        %1762 = vmatprep.subr.mxu0 0.0
        %1763 = vmatpush1.msra.mxu0 0.0
        %1764 = vmatprep.subr.mxu0 0.0
        %1765 = vmatpush1.msra.mxu0 0.0
        %1766 = vmatprep.subr.mxu0 0.0
        %1767 = vmatpush1.msra.mxu0 0.0
        %1768 = vmatprep.subr.mxu0 0.0
        %1769 = vmatpush1.msra.mxu0 0.0
        %1770 = vmatprep.subr.mxu0 0.0
        %1771 = vmatpush1.msra.mxu0 0.0
        %1772 = vmatprep.subr.mxu0 0.0
        %1773 = vmatpush1.msra.mxu0 0.0
        %1774 = vmatprep.subr.mxu0 0.0
        %1775 = vmatpush1.msra.mxu0 0.0
        %1776 = vmatprep.subr.mxu0 0.0
        %1777 = vmatpush1.msra.mxu0 %v1754
        %1778 = vmatprep.subr.mxu0 0.0
        %1779 = vmatpush1.msra.mxu0 %v1753
        %1780 = vmatprep.subr.mxu0 0.0
        %1781 = vmatpush1.msra.mxu0 %v1752
        %1782 = vmatprep.subr.mxu0 0.0
        %1783 = vmatpush1.msra.mxu0 %v1751
        %1784 = vmatprep.subr.mxu0 0.0
        %1785 = vmatpush1.msra.mxu0 %v1750
        %1786 = vmatprep.subr.mxu0 0.0
        %1787 = vmatpush1.msra.mxu0 %v1749
        %1788 = vmatprep.subr.mxu0 0.0
        %1789 = vmatpush1.msra.mxu0 %v1748
        %1790 = vmatprep.subr.mxu0 0.0
        %1791 = vmatpush1.msra.mxu0 %v1747
        %1792 = vmatprep.subr.mxu0 0.0
        %1793 = vmatpush2.msra.mxu0 0.0
        %1794 = vmatprep.subr.mxu0 0.0
        %1795 = vmatpush2.msra.mxu0 0.0
        %1796 = vmatprep.subr.mxu0 0.0
        %1797 = vmatpush2.msra.mxu0 0.0
        %1798 = vmatprep.subr.mxu0 0.0
        %1799 = vmatpush2.msra.mxu0 0.0
        %1800 = vmatprep.subr.mxu0 0.0
        %1801 = vmatpush2.msra.mxu0 0.0
        %1802 = vmatprep.subr.mxu0 0.0
        %1803 = vmatpush2.msra.mxu0 0.0
        %1804 = vmatprep.subr.mxu0 0.0
        %1805 = vmatpush2.msra.mxu0 0.0
        %1806 = vmatprep.subr.mxu0 0.0
        %1807 = vmatpush2.msra.mxu0 0.0
        %1808 = vmatprep.subr.mxu0 0.0
        %1809 = vmatpush2.msra.mxu0 0.0
        %1810 = vmatprep.subr.mxu0 0.0
        %1811 = vmatpush2.msra.mxu0 0.0
        %1812 = vmatprep.subr.mxu0 0.0
        %1813 = vmatpush2.msra.mxu0 0.0
        %1814 = vmatprep.subr.mxu0 0.0
        %1815 = vmatpush2.msra.mxu0 0.0
        %1816 = vmatprep.subr.mxu0 0.0
        %1817 = vmatpush2.msra.mxu0 0.0
        %1818 = vmatprep.subr.mxu0 0.0
        %1819 = vmatpush2.msra.mxu0 0.0
        %1820 = vmatprep.subr.mxu0 0.0
        %1821 = vmatpush2.msra.mxu0 0.0
        %1822 = vmatprep.subr.mxu0 0.0
        %1823 = vmatpush2.msra.mxu0 0.0
        %1824 = vmatprep.mubr.f32.mxu0 0.0
        %1825 = vmatmul.mubr.f32.gmra.mxu0 %v1758
        %v1826 = vpop.f32.mrf.mxu0
        %v1827 = vadd.f32 0.0, %v1826
        %v1828 = vpop.f32.mrf.mxu0
        %1829 = vdwg.mxu0
        %v1830 = vadd.f32 %v1741, %v1827
        %v1831 = vmul.f32 %v1177, %v1198
        %1833 = vrot.lane.b32.xlu0 %v1831, 64
        %v1834 = vpop.permute.xlu0 %1833
        %v1836 = vadd.f32 %v1831, %v1834
        %v1837 = vmul.f32 %v1177, %v1431
        %1839 = vrot.lane.b32.xlu0 %v1837, 64
        %v1840 = vpop.permute.xlu0 %1839
        %v1842 = vsub.f32 %v1837, %v1840
        %v1843 = vmul.f32 %v1836, %v1836
        %v1844 = vmul.f32 %v1842, %v1842
        %1846 = vrot.lane.b32.xlu0 %v1844, 64
        %v1847 = vpop.permute.xlu0 %1846
        %v1849 = vadd.f32 %v1843, %v1847
        %v1850 = vrsqrt.pop %v1849
        %v1851 = vmul.f32 %v1849, %v1850
        %vm1852 = vcmp.eq.f32.partialorder %v1849, inf
        %v1853 = vsel %vm1852, %v1849, %v1851
        %vm1854 = vcmp.eq.f32.partialorder %v1849, 0.0
        %v1855 = vand.u32 %v1849, 2147483648
        %v1856 = vsel %vm1854, %v1855, %v1853
        %v1857 = vadd.f32 %v1856, 1e-08
        %v1858 = vrcp.pop %v1857
        %v1859 = vmul.f32 %v1836, %v1858
        %v1860 = vld [vmem:[#allocation6 + $0x180] sm:$0xff]
        %v1861 = vld [vmem:[#allocation6 + $0x188] sm:$0xff]
        %v1862 = vld [vmem:[#allocation6 + $0x190] sm:$0xff]
        %v1863 = vld [vmem:[#allocation6 + $0x198] sm:$0xff]
        %v1864 = vld [vmem:[#allocation6 + $0x1a0] sm:$0xff]
        %v1865 = vld [vmem:[#allocation6 + $0x1a8] sm:$0xff]
        %v1866 = vld [vmem:[#allocation6 + $0x1b0] sm:$0xff]
        %v1867 = vld [vmem:[#allocation6 + $0x1b8] sm:$0xff]
        %v1869 = vsel %vm1277, %v1859, 0
        %1871 = vmatprep.subr.mxu0 0.0
        %1872 = vmatpush1.msra.mxu0 0.0
        %1873 = vmatprep.subr.mxu0 0.0
        %1874 = vmatpush1.msra.mxu0 0.0
        %1875 = vmatprep.subr.mxu0 0.0
        %1876 = vmatpush1.msra.mxu0 0.0
        %1877 = vmatprep.subr.mxu0 0.0
        %1878 = vmatpush1.msra.mxu0 0.0
        %1879 = vmatprep.subr.mxu0 0.0
        %1880 = vmatpush1.msra.mxu0 0.0
        %1881 = vmatprep.subr.mxu0 0.0
        %1882 = vmatpush1.msra.mxu0 0.0
        %1883 = vmatprep.subr.mxu0 0.0
        %1884 = vmatpush1.msra.mxu0 0.0
        %1885 = vmatprep.subr.mxu0 0.0
        %1886 = vmatpush1.msra.mxu0 0.0
        %1887 = vmatprep.subr.mxu0 0.0
        %1888 = vmatpush1.msra.mxu0 %v1867
        %1889 = vmatprep.subr.mxu0 0.0
        %1890 = vmatpush1.msra.mxu0 %v1866
        %1891 = vmatprep.subr.mxu0 0.0
        %1892 = vmatpush1.msra.mxu0 %v1865
        %1893 = vmatprep.subr.mxu0 0.0
        %1894 = vmatpush1.msra.mxu0 %v1864
        %1895 = vmatprep.subr.mxu0 0.0
        %1896 = vmatpush1.msra.mxu0 %v1863
        %1897 = vmatprep.subr.mxu0 0.0
        %1898 = vmatpush1.msra.mxu0 %v1862
        %1899 = vmatprep.subr.mxu0 0.0
        %1900 = vmatpush1.msra.mxu0 %v1861
        %1901 = vmatprep.subr.mxu0 0.0
        %1902 = vmatpush1.msra.mxu0 %v1860
        %1903 = vmatprep.subr.mxu0 0.0
        %1904 = vmatpush2.msra.mxu0 0.0
        %1905 = vmatprep.subr.mxu0 0.0
        %1906 = vmatpush2.msra.mxu0 0.0
        %1907 = vmatprep.subr.mxu0 0.0
        %1908 = vmatpush2.msra.mxu0 0.0
        %1909 = vmatprep.subr.mxu0 0.0
        %1910 = vmatpush2.msra.mxu0 0.0
        %1911 = vmatprep.subr.mxu0 0.0
        %1912 = vmatpush2.msra.mxu0 0.0
        %1913 = vmatprep.subr.mxu0 0.0
        %1914 = vmatpush2.msra.mxu0 0.0
        %1915 = vmatprep.subr.mxu0 0.0
        %1916 = vmatpush2.msra.mxu0 0.0
        %1917 = vmatprep.subr.mxu0 0.0
        %1918 = vmatpush2.msra.mxu0 0.0
        %1919 = vmatprep.subr.mxu0 0.0
        %1920 = vmatpush2.msra.mxu0 0.0
        %1921 = vmatprep.subr.mxu0 0.0
        %1922 = vmatpush2.msra.mxu0 0.0
        %1923 = vmatprep.subr.mxu0 0.0
        %1924 = vmatpush2.msra.mxu0 0.0
        %1925 = vmatprep.subr.mxu0 0.0
        %1926 = vmatpush2.msra.mxu0 0.0
        %1927 = vmatprep.subr.mxu0 0.0
        %1928 = vmatpush2.msra.mxu0 0.0
        %1929 = vmatprep.subr.mxu0 0.0
        %1930 = vmatpush2.msra.mxu0 0.0
        %1931 = vmatprep.subr.mxu0 0.0
        %1932 = vmatpush2.msra.mxu0 0.0
        %1933 = vmatprep.subr.mxu0 0.0
        %1934 = vmatpush2.msra.mxu0 0.0
        %1935 = vmatprep.mubr.f32.mxu0 0.0
        %1936 = vmatmul.mubr.f32.gmra.mxu0 %v1869
        %v1937 = vpop.f32.mrf.mxu0
        %v1938 = vadd.f32 0.0, %v1937
        %v1939 = vpop.f32.mrf.mxu0
        %1940 = vdwg.mxu0
        %v1941 = vadd.f32 %v1830, %v1938
        %1943 = vrot.lane.b32.xlu0 %v1858, 64
        %v1944 = vpop.permute.xlu0 %1943
        %v1946 = vmul.f32 %v1842, %v1944
        %v1947 = vld [vmem:[#allocation6 + $0x1c0] sm:$0xff]
        %v1948 = vld [vmem:[#allocation6 + $0x1c8] sm:$0xff]
        %v1949 = vld [vmem:[#allocation6 + $0x1d0] sm:$0xff]
        %v1950 = vld [vmem:[#allocation6 + $0x1d8] sm:$0xff]
        %v1951 = vld [vmem:[#allocation6 + $0x1e0] sm:$0xff]
        %v1952 = vld [vmem:[#allocation6 + $0x1e8] sm:$0xff]
        %v1953 = vld [vmem:[#allocation6 + $0x1f0] sm:$0xff]
        %v1954 = vld [vmem:[#allocation6 + $0x1f8] sm:$0xff]
        %1956 = vrot.lane.b32.xlu0 %v1946, 64
        %v1957 = vpop.permute.xlu0 %1956
        %v1958 = vsel %vm1277, %v1957, 0
        %1960 = vmatprep.subr.mxu0 0.0
        %1961 = vmatpush1.msra.mxu0 0.0
        %1962 = vmatprep.subr.mxu0 0.0
        %1963 = vmatpush1.msra.mxu0 0.0
        %1964 = vmatprep.subr.mxu0 0.0
        %1965 = vmatpush1.msra.mxu0 0.0
        %1966 = vmatprep.subr.mxu0 0.0
        %1967 = vmatpush1.msra.mxu0 0.0
        %1968 = vmatprep.subr.mxu0 0.0
        %1969 = vmatpush1.msra.mxu0 0.0
        %1970 = vmatprep.subr.mxu0 0.0
        %1971 = vmatpush1.msra.mxu0 0.0
        %1972 = vmatprep.subr.mxu0 0.0
        %1973 = vmatpush1.msra.mxu0 0.0
        %1974 = vmatprep.subr.mxu0 0.0
        %1975 = vmatpush1.msra.mxu0 0.0
        %1976 = vmatprep.subr.mxu0 0.0
        %1977 = vmatpush1.msra.mxu0 %v1954
        %1978 = vmatprep.subr.mxu0 0.0
        %1979 = vmatpush1.msra.mxu0 %v1953
        %1980 = vmatprep.subr.mxu0 0.0
        %1981 = vmatpush1.msra.mxu0 %v1952
        %1982 = vmatprep.subr.mxu0 0.0
        %1983 = vmatpush1.msra.mxu0 %v1951
        %1984 = vmatprep.subr.mxu0 0.0
        %1985 = vmatpush1.msra.mxu0 %v1950
        %1986 = vmatprep.subr.mxu0 0.0
        %1987 = vmatpush1.msra.mxu0 %v1949
        %1988 = vmatprep.subr.mxu0 0.0
        %1989 = vmatpush1.msra.mxu0 %v1948
        %1990 = vmatprep.subr.mxu0 0.0
        %1991 = vmatpush1.msra.mxu0 %v1947
        %1992 = vmatprep.subr.mxu0 0.0
        %1993 = vmatpush2.msra.mxu0 0.0
        %1994 = vmatprep.subr.mxu0 0.0
        %1995 = vmatpush2.msra.mxu0 0.0
        %1996 = vmatprep.subr.mxu0 0.0
        %1997 = vmatpush2.msra.mxu0 0.0
        %1998 = vmatprep.subr.mxu0 0.0
        %1999 = vmatpush2.msra.mxu0 0.0
        %2000 = vmatprep.subr.mxu0 0.0
        %2001 = vmatpush2.msra.mxu0 0.0
        %2002 = vmatprep.subr.mxu0 0.0
        %2003 = vmatpush2.msra.mxu0 0.0
        %2004 = vmatprep.subr.mxu0 0.0
        %2005 = vmatpush2.msra.mxu0 0.0
        %2006 = vmatprep.subr.mxu0 0.0
        %2007 = vmatpush2.msra.mxu0 0.0
        %2008 = vmatprep.subr.mxu0 0.0
        %2009 = vmatpush2.msra.mxu0 0.0
        %2010 = vmatprep.subr.mxu0 0.0
        %2011 = vmatpush2.msra.mxu0 0.0
        %2012 = vmatprep.subr.mxu0 0.0
        %2013 = vmatpush2.msra.mxu0 0.0
        %2014 = vmatprep.subr.mxu0 0.0
        %2015 = vmatpush2.msra.mxu0 0.0
        %2016 = vmatprep.subr.mxu0 0.0
        %2017 = vmatpush2.msra.mxu0 0.0
        %2018 = vmatprep.subr.mxu0 0.0
        %2019 = vmatpush2.msra.mxu0 0.0
        %2020 = vmatprep.subr.mxu0 0.0
        %2021 = vmatpush2.msra.mxu0 0.0
        %2022 = vmatprep.subr.mxu0 0.0
        %2023 = vmatpush2.msra.mxu0 0.0
        %2024 = vmatprep.mubr.f32.mxu0 0.0
        %2025 = vmatmul.mubr.f32.gmra.mxu0 %v1958
        %v2026 = vpop.f32.mrf.mxu0
        %v2027 = vadd.f32 0.0, %v2026
        %v2028 = vpop.f32.mrf.mxu0
        %2029 = vdwg.mxu0
        %v2030 = vadd.f32 %v1941, %v2027
        %v2031 = vmul.f32 %v1177, %v1219
        %2033 = vrot.lane.b32.xlu0 %v2031, 64
        %v2034 = vpop.permute.xlu0 %2033
        %v2036 = vadd.f32 %v2031, %v2034
        %v2037 = vmul.f32 %v1177, %v1635
        %2039 = vrot.lane.b32.xlu0 %v2037, 64
        %v2040 = vpop.permute.xlu0 %2039
        %v2042 = vsub.f32 %v2037, %v2040
        %v2043 = vmul.f32 %v2036, %v2036
        %v2044 = vmul.f32 %v2042, %v2042
        %2046 = vrot.lane.b32.xlu0 %v2044, 64
        %v2047 = vpop.permute.xlu0 %2046
        %v2049 = vadd.f32 %v2043, %v2047
        %v2050 = vrsqrt.pop %v2049
        %v2051 = vmul.f32 %v2049, %v2050
        %vm2052 = vcmp.eq.f32.partialorder %v2049, inf
        %v2053 = vsel %vm2052, %v2049, %v2051
        %vm2054 = vcmp.eq.f32.partialorder %v2049, 0.0
        %v2055 = vand.u32 %v2049, 2147483648
        %v2056 = vsel %vm2054, %v2055, %v2053
        %v2057 = vadd.f32 %v2056, 1e-08
        %v2058 = vrcp.pop %v2057
        %v2059 = vmul.f32 %v2036, %v2058
        %v2060 = vld [vmem:[#allocation6 + $0x200] sm:$0xff]
        %v2061 = vld [vmem:[#allocation6 + $0x208] sm:$0xff]
        %v2062 = vld [vmem:[#allocation6 + $0x210] sm:$0xff]
        %v2063 = vld [vmem:[#allocation6 + $0x218] sm:$0xff]
        %v2064 = vld [vmem:[#allocation6 + $0x220] sm:$0xff]
        %v2065 = vld [vmem:[#allocation6 + $0x228] sm:$0xff]
        %v2066 = vld [vmem:[#allocation6 + $0x230] sm:$0xff]
        %v2067 = vld [vmem:[#allocation6 + $0x238] sm:$0xff]
        %v2069 = vsel %vm1277, %v2059, 0
        %2071 = vmatprep.subr.mxu0 0.0
        %2072 = vmatpush1.msra.mxu0 0.0
        %2073 = vmatprep.subr.mxu0 0.0
        %2074 = vmatpush1.msra.mxu0 0.0
        %2075 = vmatprep.subr.mxu0 0.0
        %2076 = vmatpush1.msra.mxu0 0.0
        %2077 = vmatprep.subr.mxu0 0.0
        %2078 = vmatpush1.msra.mxu0 0.0
        %2079 = vmatprep.subr.mxu0 0.0
        %2080 = vmatpush1.msra.mxu0 0.0
        %2081 = vmatprep.subr.mxu0 0.0
        %2082 = vmatpush1.msra.mxu0 0.0
        %2083 = vmatprep.subr.mxu0 0.0
        %2084 = vmatpush1.msra.mxu0 0.0
        %2085 = vmatprep.subr.mxu0 0.0
        %2086 = vmatpush1.msra.mxu0 0.0
        %2087 = vmatprep.subr.mxu0 0.0
        %2088 = vmatpush1.msra.mxu0 %v2067
        %2089 = vmatprep.subr.mxu0 0.0
        %2090 = vmatpush1.msra.mxu0 %v2066
        %2091 = vmatprep.subr.mxu0 0.0
        %2092 = vmatpush1.msra.mxu0 %v2065
        %2093 = vmatprep.subr.mxu0 0.0
        %2094 = vmatpush1.msra.mxu0 %v2064
        %2095 = vmatprep.subr.mxu0 0.0
        %2096 = vmatpush1.msra.mxu0 %v2063
        %2097 = vmatprep.subr.mxu0 0.0
        %2098 = vmatpush1.msra.mxu0 %v2062
        %2099 = vmatprep.subr.mxu0 0.0
        %2100 = vmatpush1.msra.mxu0 %v2061
        %2101 = vmatprep.subr.mxu0 0.0
        %2102 = vmatpush1.msra.mxu0 %v2060
        %2103 = vmatprep.subr.mxu0 0.0
        %2104 = vmatpush2.msra.mxu0 0.0
        %2105 = vmatprep.subr.mxu0 0.0
        %2106 = vmatpush2.msra.mxu0 0.0
        %2107 = vmatprep.subr.mxu0 0.0
        %2108 = vmatpush2.msra.mxu0 0.0
        %2109 = vmatprep.subr.mxu0 0.0
        %2110 = vmatpush2.msra.mxu0 0.0
        %2111 = vmatprep.subr.mxu0 0.0
        %2112 = vmatpush2.msra.mxu0 0.0
        %2113 = vmatprep.subr.mxu0 0.0
        %2114 = vmatpush2.msra.mxu0 0.0
        %2115 = vmatprep.subr.mxu0 0.0
        %2116 = vmatpush2.msra.mxu0 0.0
        %2117 = vmatprep.subr.mxu0 0.0
        %2118 = vmatpush2.msra.mxu0 0.0
        %2119 = vmatprep.subr.mxu0 0.0
        %2120 = vmatpush2.msra.mxu0 0.0
        %2121 = vmatprep.subr.mxu0 0.0
        %2122 = vmatpush2.msra.mxu0 0.0
        %2123 = vmatprep.subr.mxu0 0.0
        %2124 = vmatpush2.msra.mxu0 0.0
        %2125 = vmatprep.subr.mxu0 0.0
        %2126 = vmatpush2.msra.mxu0 0.0
        %2127 = vmatprep.subr.mxu0 0.0
        %2128 = vmatpush2.msra.mxu0 0.0
        %2129 = vmatprep.subr.mxu0 0.0
        %2130 = vmatpush2.msra.mxu0 0.0
        %2131 = vmatprep.subr.mxu0 0.0
        %2132 = vmatpush2.msra.mxu0 0.0
        %2133 = vmatprep.subr.mxu0 0.0
        %2134 = vmatpush2.msra.mxu0 0.0
        %2135 = vmatprep.mubr.f32.mxu0 0.0
        %2136 = vmatmul.mubr.f32.gmra.mxu0 %v2069
        %v2137 = vpop.f32.mrf.mxu0
        %v2138 = vadd.f32 0.0, %v2137
        %v2139 = vpop.f32.mrf.mxu0
        %2140 = vdwg.mxu0
        %v2141 = vadd.f32 %v2030, %v2138
        %2143 = vrot.lane.b32.xlu0 %v2058, 64
        %v2144 = vpop.permute.xlu0 %2143
        %v2146 = vmul.f32 %v2042, %v2144
        %v2147 = vld [vmem:[#allocation6 + $0x240] sm:$0xff]
        %v2148 = vld [vmem:[#allocation6 + $0x248] sm:$0xff]
        %v2149 = vld [vmem:[#allocation6 + $0x250] sm:$0xff]
        %v2150 = vld [vmem:[#allocation6 + $0x258] sm:$0xff]
        %v2151 = vld [vmem:[#allocation6 + $0x260] sm:$0xff]
        %v2152 = vld [vmem:[#allocation6 + $0x268] sm:$0xff]
        %v2153 = vld [vmem:[#allocation6 + $0x270] sm:$0xff]
        %v2154 = vld [vmem:[#allocation6 + $0x278] sm:$0xff]
        %2156 = vrot.lane.b32.xlu0 %v2146, 64
        %v2157 = vpop.permute.xlu0 %2156
        %v2158 = vsel %vm1277, %v2157, 0
        %2160 = vmatprep.subr.mxu0 0.0
        %2161 = vmatpush1.msra.mxu0 0.0
        %2162 = vmatprep.subr.mxu0 0.0
        %2163 = vmatpush1.msra.mxu0 0.0
        %2164 = vmatprep.subr.mxu0 0.0
        %2165 = vmatpush1.msra.mxu0 0.0
        %2166 = vmatprep.subr.mxu0 0.0
        %2167 = vmatpush1.msra.mxu0 0.0
        %2168 = vmatprep.subr.mxu0 0.0
        %2169 = vmatpush1.msra.mxu0 0.0
        %2170 = vmatprep.subr.mxu0 0.0
        %2171 = vmatpush1.msra.mxu0 0.0
        %2172 = vmatprep.subr.mxu0 0.0
        %2173 = vmatpush1.msra.mxu0 0.0
        %2174 = vmatprep.subr.mxu0 0.0
        %2175 = vmatpush1.msra.mxu0 0.0
        %2176 = vmatprep.subr.mxu0 0.0
        %2177 = vmatpush1.msra.mxu0 %v2154
        %2178 = vmatprep.subr.mxu0 0.0
        %2179 = vmatpush1.msra.mxu0 %v2153
        %2180 = vmatprep.subr.mxu0 0.0
        %2181 = vmatpush1.msra.mxu0 %v2152
        %2182 = vmatprep.subr.mxu0 0.0
        %2183 = vmatpush1.msra.mxu0 %v2151
        %2184 = vmatprep.subr.mxu0 0.0
        %2185 = vmatpush1.msra.mxu0 %v2150
        %2186 = vmatprep.subr.mxu0 0.0
        %2187 = vmatpush1.msra.mxu0 %v2149
        %2188 = vmatprep.subr.mxu0 0.0
        %2189 = vmatpush1.msra.mxu0 %v2148
        %2190 = vmatprep.subr.mxu0 0.0
        %2191 = vmatpush1.msra.mxu0 %v2147
        %2192 = vmatprep.subr.mxu0 0.0
        %2193 = vmatpush2.msra.mxu0 0.0
        %2194 = vmatprep.subr.mxu0 0.0
        %2195 = vmatpush2.msra.mxu0 0.0
        %2196 = vmatprep.subr.mxu0 0.0
        %2197 = vmatpush2.msra.mxu0 0.0
        %2198 = vmatprep.subr.mxu0 0.0
        %2199 = vmatpush2.msra.mxu0 0.0
        %2200 = vmatprep.subr.mxu0 0.0
        %2201 = vmatpush2.msra.mxu0 0.0
        %2202 = vmatprep.subr.mxu0 0.0
        %2203 = vmatpush2.msra.mxu0 0.0
        %2204 = vmatprep.subr.mxu0 0.0
        %2205 = vmatpush2.msra.mxu0 0.0
        %2206 = vmatprep.subr.mxu0 0.0
        %2207 = vmatpush2.msra.mxu0 0.0
        %2208 = vmatprep.subr.mxu0 0.0
        %2209 = vmatpush2.msra.mxu0 0.0
        %2210 = vmatprep.subr.mxu0 0.0
        %2211 = vmatpush2.msra.mxu0 0.0
        %2212 = vmatprep.subr.mxu0 0.0
        %2213 = vmatpush2.msra.mxu0 0.0
        %2214 = vmatprep.subr.mxu0 0.0
        %2215 = vmatpush2.msra.mxu0 0.0
        %2216 = vmatprep.subr.mxu0 0.0
        %2217 = vmatpush2.msra.mxu0 0.0
        %2218 = vmatprep.subr.mxu0 0.0
        %2219 = vmatpush2.msra.mxu0 0.0
        %2220 = vmatprep.subr.mxu0 0.0
        %2221 = vmatpush2.msra.mxu0 0.0
        %2222 = vmatprep.subr.mxu0 0.0
        %2223 = vmatpush2.msra.mxu0 0.0
        %2224 = vmatprep.mubr.f32.mxu0 0.0
        %2225 = vmatmul.mubr.f32.gmra.mxu0 %v2158
        %v2226 = vpop.f32.mrf.mxu0
        %v2227 = vadd.f32 0.0, %v2226
        %v2228 = vpop.f32.mrf.mxu0
        %2229 = vdwg.mxu0
        %v2230 = vadd.f32 %v2141, %v2227
        %v2231 = vmul.f32 %v1198, %v1219
        %2233 = vrot.lane.b32.xlu0 %v2231, 64
        %v2234 = vpop.permute.xlu0 %2233
        %v2236 = vadd.f32 %v2231, %v2234
        %v2237 = vmul.f32 %v1198, %v1635
        %2239 = vrot.lane.b32.xlu0 %v2237, 64
        %v2240 = vpop.permute.xlu0 %2239
        %v2242 = vsub.f32 %v2237, %v2240
        %v2243 = vmul.f32 %v2236, %v2236
        %v2244 = vmul.f32 %v2242, %v2242
        %2246 = vrot.lane.b32.xlu0 %v2244, 64
        %v2247 = vpop.permute.xlu0 %2246
        %v2249 = vadd.f32 %v2243, %v2247
        %v2250 = vrsqrt.pop %v2249
        %v2251 = vmul.f32 %v2249, %v2250
        %vm2252 = vcmp.eq.f32.partialorder %v2249, inf
        %v2253 = vsel %vm2252, %v2249, %v2251
        %vm2254 = vcmp.eq.f32.partialorder %v2249, 0.0
        %v2255 = vand.u32 %v2249, 2147483648
        %v2256 = vsel %vm2254, %v2255, %v2253
        %v2257 = vadd.f32 %v2256, 1e-08
        %v2258 = vrcp.pop %v2257
        %v2259 = vmul.f32 %v2236, %v2258
        %v2260 = vld [vmem:[#allocation6 + $0x280] sm:$0xff]
        %v2261 = vld [vmem:[#allocation6 + $0x288] sm:$0xff]
        %v2262 = vld [vmem:[#allocation6 + $0x290] sm:$0xff]
        %v2263 = vld [vmem:[#allocation6 + $0x298] sm:$0xff]
        %v2264 = vld [vmem:[#allocation6 + $0x2a0] sm:$0xff]
        %v2265 = vld [vmem:[#allocation6 + $0x2a8] sm:$0xff]
        %v2266 = vld [vmem:[#allocation6 + $0x2b0] sm:$0xff]
        %v2267 = vld [vmem:[#allocation6 + $0x2b8] sm:$0xff]
        %v2269 = vsel %vm1277, %v2259, 0
        %2271 = vmatprep.subr.mxu0 0.0
        %2272 = vmatpush1.msra.mxu0 0.0
        %2273 = vmatprep.subr.mxu0 0.0
        %2274 = vmatpush1.msra.mxu0 0.0
        %2275 = vmatprep.subr.mxu0 0.0
        %2276 = vmatpush1.msra.mxu0 0.0
        %2277 = vmatprep.subr.mxu0 0.0
        %2278 = vmatpush1.msra.mxu0 0.0
        %2279 = vmatprep.subr.mxu0 0.0
        %2280 = vmatpush1.msra.mxu0 0.0
        %2281 = vmatprep.subr.mxu0 0.0
        %2282 = vmatpush1.msra.mxu0 0.0
        %2283 = vmatprep.subr.mxu0 0.0
        %2284 = vmatpush1.msra.mxu0 0.0
        %2285 = vmatprep.subr.mxu0 0.0
        %2286 = vmatpush1.msra.mxu0 0.0
        %2287 = vmatprep.subr.mxu0 0.0
        %2288 = vmatpush1.msra.mxu0 %v2267
        %2289 = vmatprep.subr.mxu0 0.0
        %2290 = vmatpush1.msra.mxu0 %v2266
        %2291 = vmatprep.subr.mxu0 0.0
        %2292 = vmatpush1.msra.mxu0 %v2265
        %2293 = vmatprep.subr.mxu0 0.0
        %2294 = vmatpush1.msra.mxu0 %v2264
        %2295 = vmatprep.subr.mxu0 0.0
        %2296 = vmatpush1.msra.mxu0 %v2263
        %2297 = vmatprep.subr.mxu0 0.0
        %2298 = vmatpush1.msra.mxu0 %v2262
        %2299 = vmatprep.subr.mxu0 0.0
        %2300 = vmatpush1.msra.mxu0 %v2261
        %2301 = vmatprep.subr.mxu0 0.0
        %2302 = vmatpush1.msra.mxu0 %v2260
        %2303 = vmatprep.subr.mxu0 0.0
        %2304 = vmatpush2.msra.mxu0 0.0
        %2305 = vmatprep.subr.mxu0 0.0
        %2306 = vmatpush2.msra.mxu0 0.0
        %2307 = vmatprep.subr.mxu0 0.0
        %2308 = vmatpush2.msra.mxu0 0.0
        %2309 = vmatprep.subr.mxu0 0.0
        %2310 = vmatpush2.msra.mxu0 0.0
        %2311 = vmatprep.subr.mxu0 0.0
        %2312 = vmatpush2.msra.mxu0 0.0
        %2313 = vmatprep.subr.mxu0 0.0
        %2314 = vmatpush2.msra.mxu0 0.0
        %2315 = vmatprep.subr.mxu0 0.0
        %2316 = vmatpush2.msra.mxu0 0.0
        %2317 = vmatprep.subr.mxu0 0.0
        %2318 = vmatpush2.msra.mxu0 0.0
        %2319 = vmatprep.subr.mxu0 0.0
        %2320 = vmatpush2.msra.mxu0 0.0
        %2321 = vmatprep.subr.mxu0 0.0
        %2322 = vmatpush2.msra.mxu0 0.0
        %2323 = vmatprep.subr.mxu0 0.0
        %2324 = vmatpush2.msra.mxu0 0.0
        %2325 = vmatprep.subr.mxu0 0.0
        %2326 = vmatpush2.msra.mxu0 0.0
        %2327 = vmatprep.subr.mxu0 0.0
        %2328 = vmatpush2.msra.mxu0 0.0
        %2329 = vmatprep.subr.mxu0 0.0
        %2330 = vmatpush2.msra.mxu0 0.0
        %2331 = vmatprep.subr.mxu0 0.0
        %2332 = vmatpush2.msra.mxu0 0.0
        %2333 = vmatprep.subr.mxu0 0.0
        %2334 = vmatpush2.msra.mxu0 0.0
        %2335 = vmatprep.mubr.f32.mxu0 0.0
        %2336 = vmatmul.mubr.f32.gmra.mxu0 %v2269
        %v2337 = vpop.f32.mrf.mxu0
        %v2338 = vadd.f32 0.0, %v2337
        %v2339 = vpop.f32.mrf.mxu0
        %2340 = vdwg.mxu0
        %v2341 = vadd.f32 %v2230, %v2338
        %2343 = vrot.lane.b32.xlu0 %v2258, 64
        %v2344 = vpop.permute.xlu0 %2343
        %v2346 = vmul.f32 %v2242, %v2344
        %v2347 = vld [vmem:[#allocation6 + $0x2c0] sm:$0xff]
        %v2348 = vld [vmem:[#allocation6 + $0x2c8] sm:$0xff]
        %v2349 = vld [vmem:[#allocation6 + $0x2d0] sm:$0xff]
        %v2350 = vld [vmem:[#allocation6 + $0x2d8] sm:$0xff]
        %v2351 = vld [vmem:[#allocation6 + $0x2e0] sm:$0xff]
        %v2352 = vld [vmem:[#allocation6 + $0x2e8] sm:$0xff]
        %v2353 = vld [vmem:[#allocation6 + $0x2f0] sm:$0xff]
        %v2354 = vld [vmem:[#allocation6 + $0x2f8] sm:$0xff]
        %2356 = vrot.lane.b32.xlu0 %v2346, 64
        %v2357 = vpop.permute.xlu0 %2356
        %v2358 = vsel %vm1277, %v2357, 0
        %2360 = vmatprep.subr.mxu0 0.0
        %2361 = vmatpush1.msra.mxu0 0.0
        %2362 = vmatprep.subr.mxu0 0.0
        %2363 = vmatpush1.msra.mxu0 0.0
        %2364 = vmatprep.subr.mxu0 0.0
        %2365 = vmatpush1.msra.mxu0 0.0
        %2366 = vmatprep.subr.mxu0 0.0
        %2367 = vmatpush1.msra.mxu0 0.0
        %2368 = vmatprep.subr.mxu0 0.0
        %2369 = vmatpush1.msra.mxu0 0.0
        %2370 = vmatprep.subr.mxu0 0.0
        %2371 = vmatpush1.msra.mxu0 0.0
        %2372 = vmatprep.subr.mxu0 0.0
        %2373 = vmatpush1.msra.mxu0 0.0
        %2374 = vmatprep.subr.mxu0 0.0
        %2375 = vmatpush1.msra.mxu0 0.0
        %2376 = vmatprep.subr.mxu0 0.0
        %2377 = vmatpush1.msra.mxu0 %v2354
        %2378 = vmatprep.subr.mxu0 0.0
        %2379 = vmatpush1.msra.mxu0 %v2353
        %2380 = vmatprep.subr.mxu0 0.0
        %2381 = vmatpush1.msra.mxu0 %v2352
        %2382 = vmatprep.subr.mxu0 0.0
        %2383 = vmatpush1.msra.mxu0 %v2351
        %2384 = vmatprep.subr.mxu0 0.0
        %2385 = vmatpush1.msra.mxu0 %v2350
        %2386 = vmatprep.subr.mxu0 0.0
        %2387 = vmatpush1.msra.mxu0 %v2349
        %2388 = vmatprep.subr.mxu0 0.0
        %2389 = vmatpush1.msra.mxu0 %v2348
        %2390 = vmatprep.subr.mxu0 0.0
        %2391 = vmatpush1.msra.mxu0 %v2347
        %2392 = vmatprep.subr.mxu0 0.0
        %2393 = vmatpush2.msra.mxu0 0.0
        %2394 = vmatprep.subr.mxu0 0.0
        %2395 = vmatpush2.msra.mxu0 0.0
        %2396 = vmatprep.subr.mxu0 0.0
        %2397 = vmatpush2.msra.mxu0 0.0
        %2398 = vmatprep.subr.mxu0 0.0
        %2399 = vmatpush2.msra.mxu0 0.0
        %2400 = vmatprep.subr.mxu0 0.0
        %2401 = vmatpush2.msra.mxu0 0.0
        %2402 = vmatprep.subr.mxu0 0.0
        %2403 = vmatpush2.msra.mxu0 0.0
        %2404 = vmatprep.subr.mxu0 0.0
        %2405 = vmatpush2.msra.mxu0 0.0
        %2406 = vmatprep.subr.mxu0 0.0
        %2407 = vmatpush2.msra.mxu0 0.0
        %2408 = vmatprep.subr.mxu0 0.0
        %2409 = vmatpush2.msra.mxu0 0.0
        %2410 = vmatprep.subr.mxu0 0.0
        %2411 = vmatpush2.msra.mxu0 0.0
        %2412 = vmatprep.subr.mxu0 0.0
        %2413 = vmatpush2.msra.mxu0 0.0
        %2414 = vmatprep.subr.mxu0 0.0
        %2415 = vmatpush2.msra.mxu0 0.0
        %2416 = vmatprep.subr.mxu0 0.0
        %2417 = vmatpush2.msra.mxu0 0.0
        %2418 = vmatprep.subr.mxu0 0.0
        %2419 = vmatpush2.msra.mxu0 0.0
        %2420 = vmatprep.subr.mxu0 0.0
        %2421 = vmatpush2.msra.mxu0 0.0
        %2422 = vmatprep.subr.mxu0 0.0
        %2423 = vmatpush2.msra.mxu0 0.0
        %2424 = vmatprep.mubr.f32.mxu0 0.0
        %2425 = vmatmul.mubr.f32.gmra.mxu0 %v2358
        %v2426 = vpop.f32.mrf.mxu0
        %v2427 = vadd.f32 0.0, %v2426
        %v2428 = vpop.f32.mrf.mxu0
        %2429 = vdwg.mxu0
        %v2430 = vadd.f32 %v2341, %v2427
        %v2431 = vld [vmem:[#allocation7] sm:$0x1]
        %v2433 = vlaneseq
        %v2434 = vshrl.u32 %v2433, 7
        %v2435 = vsub.s32 0, %v2434
        %v2436 = vrot.slane %v2431, %v2435
        %v2438 = vadd.f32 %v2430, %v2436
        %2439 = vst [vmem:[%s255] sm:$0xff] %v2438
        %p2440 = scmp.lt.s32.totalorder %s20, 1
        %s2441 = scalar_select %p2440, %s20, 1
        %s2442 = smul.addr %s2441, 8
        %s2443 = scalar_lea.vmem %s4, %s2442
        // Predicated region
        $region53: #{mac_gcc_doa_forward.1} parent=35 // pred_check
          %p2444 = pneg %p127
        $region54: #{mac_gcc_doa_forward.1} parent=35 // pred_check_branch
          %2446 = sbr.rel (%p2444) target = $region56
        $region55: #{mac_gcc_doa_forward.1} parent=35 // pred_region
          _
        $region56: #{mac_gcc_doa_forward.1} parent=35 // pred_fallthru
          _
      $region36: #{mac_gcc_doa_forward.1} parent=5 // pred_fallthru
        _
      %p2447 = scmp.le.s32.totalorder 2, %s15
      // Predicated region
      $region57: #{mac_gcc_doa_forward.1} parent=5 // pred_check
        %p2448 = pneg %p2447
      $region58: #{mac_gcc_doa_forward.1} parent=5 // pred_check_branch
        %2450 = sbr.rel (%p2448) target = $region60
      $region59: #{mac_gcc_doa_forward.1} parent=5 // pred_region
        %s2451 = ssub.s32 %s15, 2
        // Predicated region
        $region61: #{mac_gcc_doa_forward.1} parent=59 // pred_check
          %p2452 = pneg %p133
        $region62: #{mac_gcc_doa_forward.1} parent=59 // pred_check_branch
          %2454 = sbr.rel (%p2452) target = $region64
        $region63: #{mac_gcc_doa_forward.1} parent=59 // pred_region
          %p2455 = scmp.lt.s32.totalorder %s21, 1
          %s2456 = scalar_select %p2455, %s21, 1
          %s2457 = smul.addr %s2456, 8
          %s2458 = scalar_lea.vmem %s4, %s2457
        $region64: #{mac_gcc_doa_forward.1} parent=59 // pred_fallthru
          _
      $region60: #{mac_gcc_doa_forward.1} parent=5 // pred_fallthru
        _
    $region6: #{mac_gcc_doa_forward.1} parent=1 // loop_footer
      %s19 = sadd.s32 1, %s15
    $region7: #{mac_gcc_doa_forward.1} parent=1 // loop_footer_branch
      %14 = sbr.rel target = $region3
    $region8: #{mac_gcc_doa_forward.1} parent=1 // loop_exit
      _
    %2459 = vsyncpa [#allocation3], 1
    %s2460 = scalar_lea.sflag [#allocation3], 1
    %2461 = vsyncpa %s2460, 1
    %2462 = vsyncpa [#allocation5], 1
    %2463 = vsyncpa [#allocation8], 1

</llo_original>
